<compile_context>
chip_gen: v7x
topology: tpu7x:2x2x1
jax: 0.10.0
libtpu: 0.0.40
codegen_flags: <defaults>
</compile_context>

<pallas_src>
import functools

import jax
import jax.numpy as jnp
import numpy as np
from jax import lax
from jax.experimental import pallas as pl
from jax.experimental.pallas import tpu as pltpu


# ----------------------------------------------------------------- static precomputation --

def _same_padding(H, W, k, s):
    """'same'-style padding exactly as the PyTorch Conv2D wrapper computes it."""
    OH, OW = H // s, W // s
    ph = max((OH - 1) * s + k - H, 0)
    pw = max((OW - 1) * s + k - W, 0)
    return OH, OW, (ph // 2, ph - ph // 2), (pw // 2, pw - pw // 2)


def _layer_static(H0, W0, Hl, Wl, k, s, dil, cout):
    """Per-layer static data for *dense* evaluation on the original (H0, W0) grid.

    The layer logically runs on an (Hl, Wl) input with stride `s`; `dil` is the cumulative
    stride of all previous layers, i.e. one logical input-pixel step == `dil` pixels on the
    original grid (exact here because 16 -> 8 -> 4 divides evenly).

    Returns (OH, OW, tap_offsets, premask):
      * tap_offsets[t]: flat lane offset of tap t on the original grid,
      * premask: (k*k*cout, H0*W0) 0/1 matrix, pre-rolled by +offset so the kernel can mask
        BEFORE rolling:  roll(P, -off) * valid  ==  roll(P * premask, -off).
    """
    OH, OW, (pt, _), (pleft, _) = _same_padding(Hl, Wl, k, s)
    S0 = H0 * W0
    q = np.arange(S0)
    qr, qc = q // W0, q % W0
    offsets = []
    premask = np.zeros((k * k, S0), np.float32)
    for dy in range(k):
        for dx in range(k):
            t = dy * k + dx
            dr = dil * (dy - pt)          # row offset on the original grid
            dc = dil * (dx - pleft)       # col offset on the original grid
            off = dr * W0 + dc
            offsets.append(off)
            valid = ((qr + dr >= 0) & (qr + dr < H0) &
                     (qc + dc >= 0) & (qc + dc < W0)).astype(np.float32)
            premask[t] = np.roll(valid, off)
    # Repeat each tap row Cout times so it lines up with the (k*k*Cout, S0) matmul result.
    return OH, OW, tuple(offsets), np.repeat(premask, cout, axis=0)


def _subsample_matrix(H0, W0, OH, OW, step):
    """0/1 matrix selecting the stride-`step` grid: (H0*W0, OH*OW)."""
    D = np.zeros((H0 * W0, OH * OW), np.float32)
    p = np.arange(OH * OW)
    pr, pc = p // OW, p % OW
    D[(step * pr) * W0 + step * pc, p] = 1.0
    return D


def _prep_weight(w_oihw):
    """OIHW -> (k*k*Cout, Cin) bf16, rows ordered tap-major / out-channel-minor."""
    Co, Ci, kh, kw = w_oihw.shape
    w = jnp.transpose(w_oihw, (2, 3, 0, 1)).reshape(kh * kw * Co, Ci)
    return w.astype(jnp.bfloat16)


# ------------------------------------------------------------------------- fused kernel ---

def _hyper_encoder_kernel(x_ref,
                          w1_ref, b1_ref, pm1_ref,
                          w2_ref, b2_ref, pm2_ref,
                          w3_ref, b3_ref, pm3_ref,
                          dsub_ref, o_ref, *, cfgs):
    """Whole HyperEncoder for one batch element; activations stay (C, H*W) in VMEM."""

    def conv_dense(z_bf16, w_ref, b_ref, pm_ref, cfg):
        offsets, cout, relu = cfg
        s0 = z_bf16.shape[-1]
        # One deep-M MXU matmul per layer: every (tap, out-channel) row at once, f32 acc.
        p = jnp.dot(w_ref[...], z_bf16, preferred_element_type=jnp.float32)
        # Zero padding: one elementwise multiply with the pre-rolled 0/1 mask.
        p = p * pm_ref[...].astype(jnp.float32)
        acc = jnp.zeros((cout, s0), jnp.float32)
        for t, off in enumerate(offsets):
            sl = p[t * cout:(t + 1) * cout, :]
            shift = (-off) % s0
            if shift:
                sl = pltpu.roll(sl, shift, axis=1)       # XLU lane rotation (free-ish)
            acc = acc + sl
        acc = acc + b_ref[...]                           # bias broadcast along lanes, once
        return jnp.maximum(acc, 0.0) if relu else acc

    z = jnp.abs(x_ref[0]).astype(jnp.bfloat16)                               # torch.abs once
    h = conv_dense(z, w1_ref, b1_ref, pm1_ref, cfgs[0])                      # 3x3 s1 + ReLU
    h = conv_dense(h.astype(jnp.bfloat16), w2_ref, b2_ref, pm2_ref, cfgs[1])  # 5x5 s2 + ReLU
    h = conv_dense(h.astype(jnp.bfloat16), w3_ref, b3_ref, pm3_ref, cfgs[2])  # 5x5 s2
    # Single 0/1 subsample matmul folds both stride-2 stages (dense grid -> stride-4 grid).
    out = jnp.dot(h.astype(jnp.bfloat16), dsub_ref[...],
                  preferred_element_type=jnp.float32)
    o_ref[0] = out.astype(o_ref.dtype)


# ------------------------------------------------------------------------------ wrapper ---

def _const_spec(shape):
    nd = len(shape)
    return pl.BlockSpec(shape, lambda b, _nd=nd: (0,) * _nd)


def hyper_encoder_pallas(x_nchw, params):
    (w1, b1), (w2, b2), (w3, b3) = params
    B, M, H, W = x_nchw.shape
    N = w1.shape[0]
    S0 = H * W

    # Dense-evaluation geometry: strides become dilated tap offsets + one final subsample.
    OH1, OW1, offs1, pm1 = _layer_static(H, W, H, W, 3, 1, 1, N)
    OH2, OW2, offs2, pm2 = _layer_static(H, W, OH1, OW1, 5, 2, H // OH1, N)
    OH3, OW3, offs3, pm3 = _layer_static(H, W, OH2, OW2, 5, 2, H // OH2, N)
    dsub = _subsample_matrix(H, W, OH3, OW3, H // OH3)
    cfgs = ((offs1, N, True), (offs2, N, True), (offs3, N, False))

    args = (
        x_nchw.reshape(B, M, S0),                 # (B, Cin, H*W): pure reshape of NCHW
        _prep_weight(w1), b1.reshape(N, 1).astype(jnp.float32), jnp.asarray(pm1, jnp.bfloat16),
        _prep_weight(w2), b2.reshape(N, 1).astype(jnp.float32), jnp.asarray(pm2, jnp.bfloat16),
        _prep_weight(w3), b3.reshape(N, 1).astype(jnp.float32), jnp.asarray(pm3, jnp.bfloat16),
        jnp.asarray(dsub, jnp.bfloat16),
    )

    in_specs = [pl.BlockSpec((1, M, S0), lambda b: (b, 0, 0))]
    in_specs += [_const_spec(a.shape) for a in args[1:]]
    out_specs = pl.BlockSpec((1, N, OH3 * OW3), lambda b: (b, 0, 0))

    flops = int(2 * B * N * S0 *
                (len(offs1) * M + len(offs2) * N + len(offs3) * N + OH3 * OW3))
    bytes_accessed = int(sum(a.size * a.dtype.itemsize for a in args)
                         + B * N * OH3 * OW3 * x_nchw.dtype.itemsize)

    out = pl.pallas_call(
        functools.partial(_hyper_encoder_kernel, cfgs=cfgs),
        out_shape=jax.ShapeDtypeStruct((B, N, OH3 * OW3), x_nchw.dtype),
        grid_spec=pltpu.PrefetchScalarGridSpec(
            num_scalar_prefetch=0,
            grid=(B,),
            in_specs=in_specs,
            out_specs=out_specs,
        ),
        compiler_params=pltpu.CompilerParams(dimension_semantics=("parallel",)),
        cost_estimate=pl.CostEstimate(flops=flops, transcendentals=0,
                                      bytes_accessed=bytes_accessed),
    )(*args)
    return out.reshape(B, N, OH3, OW3)


# ------------------------------------------------------------------- pure-JAX reference ---

def conv2d_same_ref(x_nhwc, w_oihw, bias, stride, *, apply_abs=False, apply_relu=False):
    B, H, W, Cin = x_nhwc.shape
    Cout, _, kh, kw = w_oihw.shape
    s = int(stride)
    _, _, (pt, pb), (pleft, pright) = _same_padding(H, W, kh, s)
    x = jnp.abs(x_nhwc) if apply_abs else x_nhwc
    w_hwio = jnp.transpose(w_oihw, (2, 3, 1, 0))
    y = lax.conv_general_dilated(
        x, w_hwio, window_strides=(s, s),
        padding=[(pt, pb), (pleft, pright)],
        dimension_numbers=("NHWC", "HWIO", "NHWC"),
        precision=lax.Precision.HIGHEST,
    ) + bias.reshape(1, 1, 1, Cout)
    return jnp.maximum(y, 0.0) if apply_relu else y


def hyper_encoder_ref(x_nchw, params):
    (w1, b1), (w2, b2), (w3, b3) = params
    x = jnp.transpose(x_nchw, (0, 2, 3, 1))
    h = conv2d_same_ref(x, w1, b1, 1, apply_abs=True, apply_relu=True)
    h = conv2d_same_ref(h, w2, b2, 2, apply_relu=True)
    h = conv2d_same_ref(h, w3, b3, 2)
    return jnp.transpose(h, (0, 3, 1, 2))


def init_conv_params(key, cin, cout, k):
    """Deterministic PyTorch-like (uniform +-1/sqrt(fan_in)) init."""
    kw_, kb = jax.random.split(key)
    bound = 1.0 / np.sqrt(cin * k * k)
    w = jax.random.uniform(kw_, (cout, cin, k, k), jnp.float32, -bound, bound)
    b = jax.random.uniform(kb, (cout,), jnp.float32, -bound, bound)
    return w, b


# ------------------------------------------------------------------------------- main -----

if __name__ == "__main__":
    N_ch, M_ch = 8, 4            # HyperEncoder(N=8, M=4)
    B, H, W = 2, 16, 16

    key = jax.random.PRNGKey(0)
    kx, k1, k2, k3 = jax.random.split(key, 4)
    x = jax.random.normal(kx, (B, M_ch, H, W), jnp.float32)      # NCHW, like PyTorch

    params = (
        init_conv_params(k1, M_ch, N_ch, 3),   # conv1: 3x3 s1
        init_conv_params(k2, N_ch, N_ch, 5),   # conv2: 5x5 s2
        init_conv_params(k3, N_ch, N_ch, 5),   # conv3: 5x5 s2
    )

    out = jax.block_until_ready(jax.jit(hyper_encoder_pallas)(x, params))
    assert out.shape == (B, N_ch, H // 4, W // 4), out.shape

    ref = jax.block_until_ready(jax.jit(hyper_encoder_ref)(x, params))
    max_err = float(np.max(np.abs(np.asarray(out) - np.asarray(ref))))
    assert np.allclose(np.asarray(out), np.asarray(ref), atol=1e-2, rtol=1e-2), max_err

    print("KERNEL_OK")
</pallas_src>

<mosaic_0001>
module attributes {stable_mosaic.version = 11 : i64} {
  func.func @_hyper_encoder_kernel(%arg0: i32, %arg1: memref<1x4x256xf32, #tpu.memory_space<vmem>>, %arg2: memref<72x4xbf16, #tpu.memory_space<vmem>>, %arg3: memref<8x1xf32, #tpu.memory_space<vmem>>, %arg4: memref<72x256xbf16, #tpu.memory_space<vmem>>, %arg5: memref<200x8xbf16, #tpu.memory_space<vmem>>, %arg6: memref<8x1xf32, #tpu.memory_space<vmem>>, %arg7: memref<200x256xbf16, #tpu.memory_space<vmem>>, %arg8: memref<200x8xbf16, #tpu.memory_space<vmem>>, %arg9: memref<8x1xf32, #tpu.memory_space<vmem>>, %arg10: memref<200x256xbf16, #tpu.memory_space<vmem>>, %arg11: memref<256x16xbf16, #tpu.memory_space<vmem>>, %arg12: memref<1x8x16xf32, #tpu.memory_space<vmem>>) attributes {dimension_semantics = [#tpu.dimension_semantics<parallel>], iteration_bounds = array<i64: 2>, scalar_prefetch = 0 : i64, scratch_operands = 0 : i64, tpu.core_type = #tpu.core_type<tc>, window_params = [{transform_indices = @transform_0, window_bounds = array<i64: 1, 4, 256>}, {pipeline_mode = #tpu.pipeline_mode<synchronous>, transform_indices = @transform_1, window_bounds = array<i64: 72, 4>}, {pipeline_mode = #tpu.pipeline_mode<synchronous>, transform_indices = @transform_2, window_bounds = array<i64: 8, 1>}, {pipeline_mode = #tpu.pipeline_mode<synchronous>, transform_indices = @transform_3, window_bounds = array<i64: 72, 256>}, {pipeline_mode = #tpu.pipeline_mode<synchronous>, transform_indices = @transform_4, window_bounds = array<i64: 200, 8>}, {pipeline_mode = #tpu.pipeline_mode<synchronous>, transform_indices = @transform_5, window_bounds = array<i64: 8, 1>}, {pipeline_mode = #tpu.pipeline_mode<synchronous>, transform_indices = @transform_6, window_bounds = array<i64: 200, 256>}, {pipeline_mode = #tpu.pipeline_mode<synchronous>, transform_indices = @transform_7, window_bounds = array<i64: 200, 8>}, {pipeline_mode = #tpu.pipeline_mode<synchronous>, transform_indices = @transform_8, window_bounds = array<i64: 8, 1>}, {pipeline_mode = #tpu.pipeline_mode<synchronous>, transform_indices = @transform_9, window_bounds = array<i64: 200, 256>}, {pipeline_mode = #tpu.pipeline_mode<synchronous>, transform_indices = @transform_10, window_bounds = array<i64: 256, 16>}, {transform_indices = @transform_11, window_bounds = array<i64: 1, 8, 16>}]} {
    %c0 = arith.constant 0 : index
    %c0_0 = arith.constant 0 : index
    %c0_1 = arith.constant 0 : index
    %0 = vector.load %arg1[%c0, %c0_0, %c0_1] : memref<1x4x256xf32, #tpu.memory_space<vmem>>, vector<1x4x256xf32>
    %1 = vector.shape_cast %0 : vector<1x4x256xf32> to vector<4x256xf32>
    %2 = math.absf %1 : vector<4x256xf32>
    %3 = arith.truncf %2 : vector<4x256xf32> to vector<4x256xbf16>
    %c0_2 = arith.constant 0 : index
    %c0_3 = arith.constant 0 : index
    %4 = vector.load %arg2[%c0_2, %c0_3] : memref<72x4xbf16, #tpu.memory_space<vmem>>, vector<72x4xbf16>
    %cst = arith.constant dense<0.000000e+00> : vector<72x256xf32>
    %5 = tpu.matmul %4, %3, %cst {dimension_numbers = #tpu.dot_dimension_numbers<[1], [0], [0], [1], [0, 0, 1, 1], [], []>} : vector<72x4xbf16>, vector<4x256xbf16>, vector<72x256xf32> -> vector<72x256xf32>
    %c0_4 = arith.constant 0 : index
    %c0_5 = arith.constant 0 : index
    %6 = vector.load %arg4[%c0_4, %c0_5] : memref<72x256xbf16, #tpu.memory_space<vmem>>, vector<72x256xbf16>
    %7 = arith.extf %6 : vector<72x256xbf16> to vector<72x256xf32>
    %8 = arith.mulf %5, %7 : vector<72x256xf32>
    %cst_6 = arith.constant 0.000000e+00 : f32
    %9 = vector.broadcast %cst_6 : f32 to vector<8x256xf32>
    %10 = vector.extract_strided_slice %8 {offsets = [0, 0], sizes = [8, 256], strides = [1, 1]} : vector<72x256xf32> to vector<8x256xf32>
    %c17_i32 = arith.constant 17 : i32
    %11 = tpu.dynamic_rotate %10 by %c17_i32 dim 1 : vector<8x256xf32>, i32 -> vector<8x256xf32>
    %12 = arith.addf %9, %11 : vector<8x256xf32>
    %13 = vector.extract_strided_slice %8 {offsets = [8, 0], sizes = [8, 256], strides = [1, 1]} : vector<72x256xf32> to vector<8x256xf32>
    %c16_i32 = arith.constant 16 : i32
    %14 = tpu.dynamic_rotate %13 by %c16_i32 dim 1 : vector<8x256xf32>, i32 -> vector<8x256xf32>
    %15 = arith.addf %12, %14 : vector<8x256xf32>
    %16 = vector.extract_strided_slice %8 {offsets = [16, 0], sizes = [8, 256], strides = [1, 1]} : vector<72x256xf32> to vector<8x256xf32>
    %c15_i32 = arith.constant 15 : i32
    %17 = tpu.dynamic_rotate %16 by %c15_i32 dim 1 : vector<8x256xf32>, i32 -> vector<8x256xf32>
    %18 = arith.addf %15, %17 : vector<8x256xf32>
    %19 = vector.extract_strided_slice %8 {offsets = [24, 0], sizes = [8, 256], strides = [1, 1]} : vector<72x256xf32> to vector<8x256xf32>
    %c1_i32 = arith.constant 1 : i32
    %20 = tpu.dynamic_rotate %19 by %c1_i32 dim 1 : vector<8x256xf32>, i32 -> vector<8x256xf32>
    %21 = arith.addf %18, %20 : vector<8x256xf32>
    %22 = vector.extract_strided_slice %8 {offsets = [32, 0], sizes = [8, 256], strides = [1, 1]} : vector<72x256xf32> to vector<8x256xf32>
    %23 = arith.addf %21, %22 : vector<8x256xf32>
    %24 = vector.extract_strided_slice %8 {offsets = [40, 0], sizes = [8, 256], strides = [1, 1]} : vector<72x256xf32> to vector<8x256xf32>
    %c255_i32 = arith.constant 255 : i32
    %25 = tpu.dynamic_rotate %24 by %c255_i32 dim 1 : vector<8x256xf32>, i32 -> vector<8x256xf32>
    %26 = arith.addf %23, %25 : vector<8x256xf32>
    %27 = vector.extract_strided_slice %8 {offsets = [48, 0], sizes = [8, 256], strides = [1, 1]} : vector<72x256xf32> to vector<8x256xf32>
    %c241_i32 = arith.constant 241 : i32
    %28 = tpu.dynamic_rotate %27 by %c241_i32 dim 1 : vector<8x256xf32>, i32 -> vector<8x256xf32>
    %29 = arith.addf %26, %28 : vector<8x256xf32>
    %30 = vector.extract_strided_slice %8 {offsets = [56, 0], sizes = [8, 256], strides = [1, 1]} : vector<72x256xf32> to vector<8x256xf32>
    %c240_i32 = arith.constant 240 : i32
    %31 = tpu.dynamic_rotate %30 by %c240_i32 dim 1 : vector<8x256xf32>, i32 -> vector<8x256xf32>
    %32 = arith.addf %29, %31 : vector<8x256xf32>
    %33 = vector.extract_strided_slice %8 {offsets = [64, 0], sizes = [8, 256], strides = [1, 1]} : vector<72x256xf32> to vector<8x256xf32>
    %c239_i32 = arith.constant 239 : i32
    %34 = tpu.dynamic_rotate %33 by %c239_i32 dim 1 : vector<8x256xf32>, i32 -> vector<8x256xf32>
    %35 = arith.addf %32, %34 : vector<8x256xf32>
    %c0_7 = arith.constant 0 : index
    %c0_8 = arith.constant 0 : index
    %36 = vector.load %arg3[%c0_7, %c0_8] : memref<8x1xf32, #tpu.memory_space<vmem>>, vector<8x1xf32>
    %37 = vector.broadcast %36 : vector<8x1xf32> to vector<8x256xf32>
    %38 = arith.addf %35, %37 : vector<8x256xf32>
    %cst_9 = arith.constant 0.000000e+00 : f32
    %39 = vector.broadcast %cst_9 : f32 to vector<8x256xf32>
    %40 = arith.maximumf %38, %39 : vector<8x256xf32>
    %41 = arith.truncf %40 : vector<8x256xf32> to vector<8x256xbf16>
    %c0_10 = arith.constant 0 : index
    %c0_11 = arith.constant 0 : index
    %42 = vector.load %arg5[%c0_10, %c0_11] : memref<200x8xbf16, #tpu.memory_space<vmem>>, vector<200x8xbf16>
    %cst_12 = arith.constant dense<0.000000e+00> : vector<200x256xf32>
    %43 = tpu.matmul %42, %41, %cst_12 {dimension_numbers = #tpu.dot_dimension_numbers<[1], [0], [0], [1], [0, 0, 1, 1], [], []>} : vector<200x8xbf16>, vector<8x256xbf16>, vector<200x256xf32> -> vector<200x256xf32>
    %c0_13 = arith.constant 0 : index
    %c0_14 = arith.constant 0 : index
    %44 = vector.load %arg7[%c0_13, %c0_14] : memref<200x256xbf16, #tpu.memory_space<vmem>>, vector<200x256xbf16>
    %45 = arith.extf %44 : vector<200x256xbf16> to vector<200x256xf32>
    %46 = arith.mulf %43, %45 : vector<200x256xf32>
    %cst_15 = arith.constant 0.000000e+00 : f32
    %47 = vector.broadcast %cst_15 : f32 to vector<8x256xf32>
    %48 = vector.extract_strided_slice %46 {offsets = [0, 0], sizes = [8, 256], strides = [1, 1]} : vector<200x256xf32> to vector<8x256xf32>
    %c17_i32_16 = arith.constant 17 : i32
    %49 = tpu.dynamic_rotate %48 by %c17_i32_16 dim 1 : vector<8x256xf32>, i32 -> vector<8x256xf32>
    %50 = arith.addf %47, %49 : vector<8x256xf32>
    %51 = vector.extract_strided_slice %46 {offsets = [8, 0], sizes = [8, 256], strides = [1, 1]} : vector<200x256xf32> to vector<8x256xf32>
    %c16_i32_17 = arith.constant 16 : i32
    %52 = tpu.dynamic_rotate %51 by %c16_i32_17 dim 1 : vector<8x256xf32>, i32 -> vector<8x256xf32>
    %53 = arith.addf %50, %52 : vector<8x256xf32>
    %54 = vector.extract_strided_slice %46 {offsets = [16, 0], sizes = [8, 256], strides = [1, 1]} : vector<200x256xf32> to vector<8x256xf32>
    %c15_i32_18 = arith.constant 15 : i32
    %55 = tpu.dynamic_rotate %54 by %c15_i32_18 dim 1 : vector<8x256xf32>, i32 -> vector<8x256xf32>
    %56 = arith.addf %53, %55 : vector<8x256xf32>
    %57 = vector.extract_strided_slice %46 {offsets = [24, 0], sizes = [8, 256], strides = [1, 1]} : vector<200x256xf32> to vector<8x256xf32>
    %c14_i32 = arith.constant 14 : i32
    %58 = tpu.dynamic_rotate %57 by %c14_i32 dim 1 : vector<8x256xf32>, i32 -> vector<8x256xf32>
    %59 = arith.addf %56, %58 : vector<8x256xf32>
    %60 = vector.extract_strided_slice %46 {offsets = [32, 0], sizes = [8, 256], strides = [1, 1]} : vector<200x256xf32> to vector<8x256xf32>
    %c13_i32 = arith.constant 13 : i32
    %61 = tpu.dynamic_rotate %60 by %c13_i32 dim 1 : vector<8x256xf32>, i32 -> vector<8x256xf32>
    %62 = arith.addf %59, %61 : vector<8x256xf32>
    %63 = vector.extract_strided_slice %46 {offsets = [40, 0], sizes = [8, 256], strides = [1, 1]} : vector<200x256xf32> to vector<8x256xf32>
    %c1_i32_19 = arith.constant 1 : i32
    %64 = tpu.dynamic_rotate %63 by %c1_i32_19 dim 1 : vector<8x256xf32>, i32 -> vector<8x256xf32>
    %65 = arith.addf %62, %64 : vector<8x256xf32>
    %66 = vector.extract_strided_slice %46 {offsets = [48, 0], sizes = [8, 256], strides = [1, 1]} : vector<200x256xf32> to vector<8x256xf32>
    %67 = arith.addf %65, %66 : vector<8x256xf32>
    %68 = vector.extract_strided_slice %46 {offsets = [56, 0], sizes = [8, 256], strides = [1, 1]} : vector<200x256xf32> to vector<8x256xf32>
    %c255_i32_20 = arith.constant 255 : i32
    %69 = tpu.dynamic_rotate %68 by %c255_i32_20 dim 1 : vector<8x256xf32>, i32 -> vector<8x256xf32>
    %70 = arith.addf %67, %69 : vector<8x256xf32>
    %71 = vector.extract_strided_slice %46 {offsets = [64, 0], sizes = [8, 256], strides = [1, 1]} : vector<200x256xf32> to vector<8x256xf32>
    %c254_i32 = arith.constant 254 : i32
    %72 = tpu.dynamic_rotate %71 by %c254_i32 dim 1 : vector<8x256xf32>, i32 -> vector<8x256xf32>
    %73 = arith.addf %70, %72 : vector<8x256xf32>
    %74 = vector.extract_strided_slice %46 {offsets = [72, 0], sizes = [8, 256], strides = [1, 1]} : vector<200x256xf32> to vector<8x256xf32>
    %c253_i32 = arith.constant 253 : i32
    %75 = tpu.dynamic_rotate %74 by %c253_i32 dim 1 : vector<8x256xf32>, i32 -> vector<8x256xf32>
    %76 = arith.addf %73, %75 : vector<8x256xf32>
    %77 = vector.extract_strided_slice %46 {offsets = [80, 0], sizes = [8, 256], strides = [1, 1]} : vector<200x256xf32> to vector<8x256xf32>
    %c241_i32_21 = arith.constant 241 : i32
    %78 = tpu.dynamic_rotate %77 by %c241_i32_21 dim 1 : vector<8x256xf32>, i32 -> vector<8x256xf32>
    %79 = arith.addf %76, %78 : vector<8x256xf32>
    %80 = vector.extract_strided_slice %46 {offsets = [88, 0], sizes = [8, 256], strides = [1, 1]} : vector<200x256xf32> to vector<8x256xf32>
    %c240_i32_22 = arith.constant 240 : i32
    %81 = tpu.dynamic_rotate %80 by %c240_i32_22 dim 1 : vector<8x256xf32>, i32 -> vector<8x256xf32>
    %82 = arith.addf %79, %81 : vector<8x256xf32>
    %83 = vector.extract_strided_slice %46 {offsets = [96, 0], sizes = [8, 256], strides = [1, 1]} : vector<200x256xf32> to vector<8x256xf32>
    %c239_i32_23 = arith.constant 239 : i32
    %84 = tpu.dynamic_rotate %83 by %c239_i32_23 dim 1 : vector<8x256xf32>, i32 -> vector<8x256xf32>
    %85 = arith.addf %82, %84 : vector<8x256xf32>
    %86 = vector.extract_strided_slice %46 {offsets = [104, 0], sizes = [8, 256], strides = [1, 1]} : vector<200x256xf32> to vector<8x256xf32>
    %c238_i32 = arith.constant 238 : i32
    %87 = tpu.dynamic_rotate %86 by %c238_i32 dim 1 : vector<8x256xf32>, i32 -> vector<8x256xf32>
    %88 = arith.addf %85, %87 : vector<8x256xf32>
    %89 = vector.extract_strided_slice %46 {offsets = [112, 0], sizes = [8, 256], strides = [1, 1]} : vector<200x256xf32> to vector<8x256xf32>
    %c237_i32 = arith.constant 237 : i32
    %90 = tpu.dynamic_rotate %89 by %c237_i32 dim 1 : vector<8x256xf32>, i32 -> vector<8x256xf32>
    %91 = arith.addf %88, %90 : vector<8x256xf32>
    %92 = vector.extract_strided_slice %46 {offsets = [120, 0], sizes = [8, 256], strides = [1, 1]} : vector<200x256xf32> to vector<8x256xf32>
    %c225_i32 = arith.constant 225 : i32
    %93 = tpu.dynamic_rotate %92 by %c225_i32 dim 1 : vector<8x256xf32>, i32 -> vector<8x256xf32>
    %94 = arith.addf %91, %93 : vector<8x256xf32>
    %95 = vector.extract_strided_slice %46 {offsets = [128, 0], sizes = [8, 256], strides = [1, 1]} : vector<200x256xf32> to vector<8x256xf32>
    %c224_i32 = arith.constant 224 : i32
    %96 = tpu.dynamic_rotate %95 by %c224_i32 dim 1 : vector<8x256xf32>, i32 -> vector<8x256xf32>
    %97 = arith.addf %94, %96 : vector<8x256xf32>
    %98 = vector.extract_strided_slice %46 {offsets = [136, 0], sizes = [8, 256], strides = [1, 1]} : vector<200x256xf32> to vector<8x256xf32>
    %c223_i32 = arith.constant 223 : i32
    %99 = tpu.dynamic_rotate %98 by %c223_i32 dim 1 : vector<8x256xf32>, i32 -> vector<8x256xf32>
    %100 = arith.addf %97, %99 : vector<8x256xf32>
    %101 = vector.extract_strided_slice %46 {offsets = [144, 0], sizes = [8, 256], strides = [1, 1]} : vector<200x256xf32> to vector<8x256xf32>
    %c222_i32 = arith.constant 222 : i32
    %102 = tpu.dynamic_rotate %101 by %c222_i32 dim 1 : vector<8x256xf32>, i32 -> vector<8x256xf32>
    %103 = arith.addf %100, %102 : vector<8x256xf32>
    %104 = vector.extract_strided_slice %46 {offsets = [152, 0], sizes = [8, 256], strides = [1, 1]} : vector<200x256xf32> to vector<8x256xf32>
    %c221_i32 = arith.constant 221 : i32
    %105 = tpu.dynamic_rotate %104 by %c221_i32 dim 1 : vector<8x256xf32>, i32 -> vector<8x256xf32>
    %106 = arith.addf %103, %105 : vector<8x256xf32>
    %107 = vector.extract_strided_slice %46 {offsets = [160, 0], sizes = [8, 256], strides = [1, 1]} : vector<200x256xf32> to vector<8x256xf32>
    %c209_i32 = arith.constant 209 : i32
    %108 = tpu.dynamic_rotate %107 by %c209_i32 dim 1 : vector<8x256xf32>, i32 -> vector<8x256xf32>
    %109 = arith.addf %106, %108 : vector<8x256xf32>
    %110 = vector.extract_strided_slice %46 {offsets = [168, 0], sizes = [8, 256], strides = [1, 1]} : vector<200x256xf32> to vector<8x256xf32>
    %c208_i32 = arith.constant 208 : i32
    %111 = tpu.dynamic_rotate %110 by %c208_i32 dim 1 : vector<8x256xf32>, i32 -> vector<8x256xf32>
    %112 = arith.addf %109, %111 : vector<8x256xf32>
    %113 = vector.extract_strided_slice %46 {offsets = [176, 0], sizes = [8, 256], strides = [1, 1]} : vector<200x256xf32> to vector<8x256xf32>
    %c207_i32 = arith.constant 207 : i32
    %114 = tpu.dynamic_rotate %113 by %c207_i32 dim 1 : vector<8x256xf32>, i32 -> vector<8x256xf32>
    %115 = arith.addf %112, %114 : vector<8x256xf32>
    %116 = vector.extract_strided_slice %46 {offsets = [184, 0], sizes = [8, 256], strides = [1, 1]} : vector<200x256xf32> to vector<8x256xf32>
    %c206_i32 = arith.constant 206 : i32
    %117 = tpu.dynamic_rotate %116 by %c206_i32 dim 1 : vector<8x256xf32>, i32 -> vector<8x256xf32>
    %118 = arith.addf %115, %117 : vector<8x256xf32>
    %119 = vector.extract_strided_slice %46 {offsets = [192, 0], sizes = [8, 256], strides = [1, 1]} : vector<200x256xf32> to vector<8x256xf32>
    %c205_i32 = arith.constant 205 : i32
    %120 = tpu.dynamic_rotate %119 by %c205_i32 dim 1 : vector<8x256xf32>, i32 -> vector<8x256xf32>
    %121 = arith.addf %118, %120 : vector<8x256xf32>
    %c0_24 = arith.constant 0 : index
    %c0_25 = arith.constant 0 : index
    %122 = vector.load %arg6[%c0_24, %c0_25] : memref<8x1xf32, #tpu.memory_space<vmem>>, vector<8x1xf32>
    %123 = vector.broadcast %122 : vector<8x1xf32> to vector<8x256xf32>
    %124 = arith.addf %121, %123 : vector<8x256xf32>
    %cst_26 = arith.constant 0.000000e+00 : f32
    %125 = vector.broadcast %cst_26 : f32 to vector<8x256xf32>
    %126 = arith.maximumf %124, %125 : vector<8x256xf32>
    %127 = arith.truncf %126 : vector<8x256xf32> to vector<8x256xbf16>
    %c0_27 = arith.constant 0 : index
    %c0_28 = arith.constant 0 : index
    %128 = vector.load %arg8[%c0_27, %c0_28] : memref<200x8xbf16, #tpu.memory_space<vmem>>, vector<200x8xbf16>
    %cst_29 = arith.constant dense<0.000000e+00> : vector<200x256xf32>
    %129 = tpu.matmul %128, %127, %cst_29 {dimension_numbers = #tpu.dot_dimension_numbers<[1], [0], [0], [1], [0, 0, 1, 1], [], []>} : vector<200x8xbf16>, vector<8x256xbf16>, vector<200x256xf32> -> vector<200x256xf32>
    %c0_30 = arith.constant 0 : index
    %c0_31 = arith.constant 0 : index
    %130 = vector.load %arg10[%c0_30, %c0_31] : memref<200x256xbf16, #tpu.memory_space<vmem>>, vector<200x256xbf16>
    %131 = arith.extf %130 : vector<200x256xbf16> to vector<200x256xf32>
    %132 = arith.mulf %129, %131 : vector<200x256xf32>
    %cst_32 = arith.constant 0.000000e+00 : f32
    %133 = vector.broadcast %cst_32 : f32 to vector<8x256xf32>
    %134 = vector.extract_strided_slice %132 {offsets = [0, 0], sizes = [8, 256], strides = [1, 1]} : vector<200x256xf32> to vector<8x256xf32>
    %c34_i32 = arith.constant 34 : i32
    %135 = tpu.dynamic_rotate %134 by %c34_i32 dim 1 : vector<8x256xf32>, i32 -> vector<8x256xf32>
    %136 = arith.addf %133, %135 : vector<8x256xf32>
    %137 = vector.extract_strided_slice %132 {offsets = [8, 0], sizes = [8, 256], strides = [1, 1]} : vector<200x256xf32> to vector<8x256xf32>
    %c32_i32 = arith.constant 32 : i32
    %138 = tpu.dynamic_rotate %137 by %c32_i32 dim 1 : vector<8x256xf32>, i32 -> vector<8x256xf32>
    %139 = arith.addf %136, %138 : vector<8x256xf32>
    %140 = vector.extract_strided_slice %132 {offsets = [16, 0], sizes = [8, 256], strides = [1, 1]} : vector<200x256xf32> to vector<8x256xf32>
    %c30_i32 = arith.constant 30 : i32
    %141 = tpu.dynamic_rotate %140 by %c30_i32 dim 1 : vector<8x256xf32>, i32 -> vector<8x256xf32>
    %142 = arith.addf %139, %141 : vector<8x256xf32>
    %143 = vector.extract_strided_slice %132 {offsets = [24, 0], sizes = [8, 256], strides = [1, 1]} : vector<200x256xf32> to vector<8x256xf32>
    %c28_i32 = arith.constant 28 : i32
    %144 = tpu.dynamic_rotate %143 by %c28_i32 dim 1 : vector<8x256xf32>, i32 -> vector<8x256xf32>
    %145 = arith.addf %142, %144 : vector<8x256xf32>
    %146 = vector.extract_strided_slice %132 {offsets = [32, 0], sizes = [8, 256], strides = [1, 1]} : vector<200x256xf32> to vector<8x256xf32>
    %c26_i32 = arith.constant 26 : i32
    %147 = tpu.dynamic_rotate %146 by %c26_i32 dim 1 : vector<8x256xf32>, i32 -> vector<8x256xf32>
    %148 = arith.addf %145, %147 : vector<8x256xf32>
    %149 = vector.extract_strided_slice %132 {offsets = [40, 0], sizes = [8, 256], strides = [1, 1]} : vector<200x256xf32> to vector<8x256xf32>
    %c2_i32 = arith.constant 2 : i32
    %150 = tpu.dynamic_rotate %149 by %c2_i32 dim 1 : vector<8x256xf32>, i32 -> vector<8x256xf32>
    %151 = arith.addf %148, %150 : vector<8x256xf32>
    %152 = vector.extract_strided_slice %132 {offsets = [48, 0], sizes = [8, 256], strides = [1, 1]} : vector<200x256xf32> to vector<8x256xf32>
    %153 = arith.addf %151, %152 : vector<8x256xf32>
    %154 = vector.extract_strided_slice %132 {offsets = [56, 0], sizes = [8, 256], strides = [1, 1]} : vector<200x256xf32> to vector<8x256xf32>
    %c254_i32_33 = arith.constant 254 : i32
    %155 = tpu.dynamic_rotate %154 by %c254_i32_33 dim 1 : vector<8x256xf32>, i32 -> vector<8x256xf32>
    %156 = arith.addf %153, %155 : vector<8x256xf32>
    %157 = vector.extract_strided_slice %132 {offsets = [64, 0], sizes = [8, 256], strides = [1, 1]} : vector<200x256xf32> to vector<8x256xf32>
    %c252_i32 = arith.constant 252 : i32
    %158 = tpu.dynamic_rotate %157 by %c252_i32 dim 1 : vector<8x256xf32>, i32 -> vector<8x256xf32>
    %159 = arith.addf %156, %158 : vector<8x256xf32>
    %160 = vector.extract_strided_slice %132 {offsets = [72, 0], sizes = [8, 256], strides = [1, 1]} : vector<200x256xf32> to vector<8x256xf32>
    %c250_i32 = arith.constant 250 : i32
    %161 = tpu.dynamic_rotate %160 by %c250_i32 dim 1 : vector<8x256xf32>, i32 -> vector<8x256xf32>
    %162 = arith.addf %159, %161 : vector<8x256xf32>
    %163 = vector.extract_strided_slice %132 {offsets = [80, 0], sizes = [8, 256], strides = [1, 1]} : vector<200x256xf32> to vector<8x256xf32>
    %c226_i32 = arith.constant 226 : i32
    %164 = tpu.dynamic_rotate %163 by %c226_i32 dim 1 : vector<8x256xf32>, i32 -> vector<8x256xf32>
    %165 = arith.addf %162, %164 : vector<8x256xf32>
    %166 = vector.extract_strided_slice %132 {offsets = [88, 0], sizes = [8, 256], strides = [1, 1]} : vector<200x256xf32> to vector<8x256xf32>
    %c224_i32_34 = arith.constant 224 : i32
    %167 = tpu.dynamic_rotate %166 by %c224_i32_34 dim 1 : vector<8x256xf32>, i32 -> vector<8x256xf32>
    %168 = arith.addf %165, %167 : vector<8x256xf32>
    %169 = vector.extract_strided_slice %132 {offsets = [96, 0], sizes = [8, 256], strides = [1, 1]} : vector<200x256xf32> to vector<8x256xf32>
    %c222_i32_35 = arith.constant 222 : i32
    %170 = tpu.dynamic_rotate %169 by %c222_i32_35 dim 1 : vector<8x256xf32>, i32 -> vector<8x256xf32>
    %171 = arith.addf %168, %170 : vector<8x256xf32>
    %172 = vector.extract_strided_slice %132 {offsets = [104, 0], sizes = [8, 256], strides = [1, 1]} : vector<200x256xf32> to vector<8x256xf32>
    %c220_i32 = arith.constant 220 : i32
    %173 = tpu.dynamic_rotate %172 by %c220_i32 dim 1 : vector<8x256xf32>, i32 -> vector<8x256xf32>
    %174 = arith.addf %171, %173 : vector<8x256xf32>
    %175 = vector.extract_strided_slice %132 {offsets = [112, 0], sizes = [8, 256], strides = [1, 1]} : vector<200x256xf32> to vector<8x256xf32>
    %c218_i32 = arith.constant 218 : i32
    %176 = tpu.dynamic_rotate %175 by %c218_i32 dim 1 : vector<8x256xf32>, i32 -> vector<8x256xf32>
    %177 = arith.addf %174, %176 : vector<8x256xf32>
    %178 = vector.extract_strided_slice %132 {offsets = [120, 0], sizes = [8, 256], strides = [1, 1]} : vector<200x256xf32> to vector<8x256xf32>
    %c194_i32 = arith.constant 194 : i32
    %179 = tpu.dynamic_rotate %178 by %c194_i32 dim 1 : vector<8x256xf32>, i32 -> vector<8x256xf32>
    %180 = arith.addf %177, %179 : vector<8x256xf32>
    %181 = vector.extract_strided_slice %132 {offsets = [128, 0], sizes = [8, 256], strides = [1, 1]} : vector<200x256xf32> to vector<8x256xf32>
    %c192_i32 = arith.constant 192 : i32
    %182 = tpu.dynamic_rotate %181 by %c192_i32 dim 1 : vector<8x256xf32>, i32 -> vector<8x256xf32>
    %183 = arith.addf %180, %182 : vector<8x256xf32>
    %184 = vector.extract_strided_slice %132 {offsets = [136, 0], sizes = [8, 256], strides = [1, 1]} : vector<200x256xf32> to vector<8x256xf32>
    %c190_i32 = arith.constant 190 : i32
    %185 = tpu.dynamic_rotate %184 by %c190_i32 dim 1 : vector<8x256xf32>, i32 -> vector<8x256xf32>
    %186 = arith.addf %183, %185 : vector<8x256xf32>
    %187 = vector.extract_strided_slice %132 {offsets = [144, 0], sizes = [8, 256], strides = [1, 1]} : vector<200x256xf32> to vector<8x256xf32>
    %c188_i32 = arith.constant 188 : i32
    %188 = tpu.dynamic_rotate %187 by %c188_i32 dim 1 : vector<8x256xf32>, i32 -> vector<8x256xf32>
    %189 = arith.addf %186, %188 : vector<8x256xf32>
    %190 = vector.extract_strided_slice %132 {offsets = [152, 0], sizes = [8, 256], strides = [1, 1]} : vector<200x256xf32> to vector<8x256xf32>
    %c186_i32 = arith.constant 186 : i32
    %191 = tpu.dynamic_rotate %190 by %c186_i32 dim 1 : vector<8x256xf32>, i32 -> vector<8x256xf32>
    %192 = arith.addf %189, %191 : vector<8x256xf32>
    %193 = vector.extract_strided_slice %132 {offsets = [160, 0], sizes = [8, 256], strides = [1, 1]} : vector<200x256xf32> to vector<8x256xf32>
    %c162_i32 = arith.constant 162 : i32
    %194 = tpu.dynamic_rotate %193 by %c162_i32 dim 1 : vector<8x256xf32>, i32 -> vector<8x256xf32>
    %195 = arith.addf %192, %194 : vector<8x256xf32>
    %196 = vector.extract_strided_slice %132 {offsets = [168, 0], sizes = [8, 256], strides = [1, 1]} : vector<200x256xf32> to vector<8x256xf32>
    %c160_i32 = arith.constant 160 : i32
    %197 = tpu.dynamic_rotate %196 by %c160_i32 dim 1 : vector<8x256xf32>, i32 -> vector<8x256xf32>
    %198 = arith.addf %195, %197 : vector<8x256xf32>
    %199 = vector.extract_strided_slice %132 {offsets = [176, 0], sizes = [8, 256], strides = [1, 1]} : vector<200x256xf32> to vector<8x256xf32>
    %c158_i32 = arith.constant 158 : i32
    %200 = tpu.dynamic_rotate %199 by %c158_i32 dim 1 : vector<8x256xf32>, i32 -> vector<8x256xf32>
    %201 = arith.addf %198, %200 : vector<8x256xf32>
    %202 = vector.extract_strided_slice %132 {offsets = [184, 0], sizes = [8, 256], strides = [1, 1]} : vector<200x256xf32> to vector<8x256xf32>
    %c156_i32 = arith.constant 156 : i32
    %203 = tpu.dynamic_rotate %202 by %c156_i32 dim 1 : vector<8x256xf32>, i32 -> vector<8x256xf32>
    %204 = arith.addf %201, %203 : vector<8x256xf32>
    %205 = vector.extract_strided_slice %132 {offsets = [192, 0], sizes = [8, 256], strides = [1, 1]} : vector<200x256xf32> to vector<8x256xf32>
    %c154_i32 = arith.constant 154 : i32
    %206 = tpu.dynamic_rotate %205 by %c154_i32 dim 1 : vector<8x256xf32>, i32 -> vector<8x256xf32>
    %207 = arith.addf %204, %206 : vector<8x256xf32>
    %c0_36 = arith.constant 0 : index
    %c0_37 = arith.constant 0 : index
    %208 = vector.load %arg9[%c0_36, %c0_37] : memref<8x1xf32, #tpu.memory_space<vmem>>, vector<8x1xf32>
    %209 = vector.broadcast %208 : vector<8x1xf32> to vector<8x256xf32>
    %210 = arith.addf %207, %209 : vector<8x256xf32>
    %211 = arith.truncf %210 : vector<8x256xf32> to vector<8x256xbf16>
    %c0_38 = arith.constant 0 : index
    %c0_39 = arith.constant 0 : index
    %212 = vector.load %arg11[%c0_38, %c0_39] : memref<256x16xbf16, #tpu.memory_space<vmem>>, vector<256x16xbf16>
    %cst_40 = arith.constant dense<0.000000e+00> : vector<8x16xf32>
    %213 = tpu.matmul %211, %212, %cst_40 {dimension_numbers = #tpu.dot_dimension_numbers<[1], [0], [0], [1], [0, 0, 1, 1], [], []>} : vector<8x256xbf16>, vector<256x16xbf16>, vector<8x16xf32> -> vector<8x16xf32>
    %c0_41 = arith.constant 0 : index
    %c0_42 = arith.constant 0 : index
    %c0_43 = arith.constant 0 : index
    %214 = vector.load %arg12[%c0_41, %c0_42, %c0_43] : memref<1x8x16xf32, #tpu.memory_space<vmem>>, vector<1x8x16xf32>
    %215 = vector.shape_cast %214 : vector<1x8x16xf32> to vector<8x16xf32>
    %216 = vector.shape_cast %213 : vector<8x16xf32> to vector<1x8x16xf32>
    tpu.vector_store %arg12[%c0_41, %c0_42, %c0_43], %216 {strides = array<i32>} : memref<1x8x16xf32, #tpu.memory_space<vmem>>, vector<1x8x16xf32>,
    return
  }
  func.func @transform_0(%arg0: i32) -> (i32, i32, i32) {
    %c0_i32 = arith.constant 0 : i32
    %c0_i32_0 = arith.constant 0 : i32
    %c0_i32_1 = arith.constant 0 : i32
    return %arg0, %c0_i32, %c0_i32_0 : i32, i32, i32
  }
  func.func @transform_1(%arg0: i32) -> (i32, i32) {
    %c0_i32 = arith.constant 0 : i32
    %c0_i32_0 = arith.constant 0 : i32
    %c0_i32_1 = arith.constant 0 : i32
    return %c0_i32, %c0_i32_0 : i32, i32
  }
  func.func @transform_2(%arg0: i32) -> (i32, i32) {
    %c0_i32 = arith.constant 0 : i32
    %c0_i32_0 = arith.constant 0 : i32
    %c0_i32_1 = arith.constant 0 : i32
    return %c0_i32, %c0_i32_0 : i32, i32
  }
  func.func @transform_3(%arg0: i32) -> (i32, i32) {
    %c0_i32 = arith.constant 0 : i32
    %c0_i32_0 = arith.constant 0 : i32
    %c0_i32_1 = arith.constant 0 : i32
    return %c0_i32, %c0_i32_0 : i32, i32
  }
  func.func @transform_4(%arg0: i32) -> (i32, i32) {
    %c0_i32 = arith.constant 0 : i32
    %c0_i32_0 = arith.constant 0 : i32
    %c0_i32_1 = arith.constant 0 : i32
    return %c0_i32, %c0_i32_0 : i32, i32
  }
  func.func @transform_5(%arg0: i32) -> (i32, i32) {
    %c0_i32 = arith.constant 0 : i32
    %c0_i32_0 = arith.constant 0 : i32
    %c0_i32_1 = arith.constant 0 : i32
    return %c0_i32, %c0_i32_0 : i32, i32
  }
  func.func @transform_6(%arg0: i32) -> (i32, i32) {
    %c0_i32 = arith.constant 0 : i32
    %c0_i32_0 = arith.constant 0 : i32
    %c0_i32_1 = arith.constant 0 : i32
    return %c0_i32, %c0_i32_0 : i32, i32
  }
  func.func @transform_7(%arg0: i32) -> (i32, i32) {
    %c0_i32 = arith.constant 0 : i32
    %c0_i32_0 = arith.constant 0 : i32
    %c0_i32_1 = arith.constant 0 : i32
    return %c0_i32, %c0_i32_0 : i32, i32
  }
  func.func @transform_8(%arg0: i32) -> (i32, i32) {
    %c0_i32 = arith.constant 0 : i32
    %c0_i32_0 = arith.constant 0 : i32
    %c0_i32_1 = arith.constant 0 : i32
    return %c0_i32, %c0_i32_0 : i32, i32
  }
  func.func @transform_9(%arg0: i32) -> (i32, i32) {
    %c0_i32 = arith.constant 0 : i32
    %c0_i32_0 = arith.constant 0 : i32
    %c0_i32_1 = arith.constant 0 : i32
    return %c0_i32, %c0_i32_0 : i32, i32
  }
  func.func @transform_10(%arg0: i32) -> (i32, i32) {
    %c0_i32 = arith.constant 0 : i32
    %c0_i32_0 = arith.constant 0 : i32
    %c0_i32_1 = arith.constant 0 : i32
    return %c0_i32, %c0_i32_0 : i32, i32
  }
  func.func @transform_11(%arg0: i32) -> (i32, i32, i32) {
    %c0_i32 = arith.constant 0 : i32
    %c0_i32_0 = arith.constant 0 : i32
    %c0_i32_1 = arith.constant 0 : i32
    return %arg0, %c0_i32, %c0_i32_0 : i32, i32, i32
  }
}

</mosaic_0001>

<llo_original>
// kernel: hyper_encoder_pallas.1
$region0: #{hyper_encoder_pallas.1}
  #allocation0 [shape = 'u32[]', space=smem, size = 0x4, offset = 0x4, fixed_abs, tag = 'smem constant byte address 0x4 - core index']
  #allocation1 [shape = 'u32[144,128]{1,0:T(1,128)}', space=vmem, size = 0x12000, scoped, tag = 'internal scratch']
  %s0 = inlined_call_operand.vmem [shape: f32[2,4,256], index: 0, kind: input, shape index: {}]
  %s1 = inlined_call_operand.vmem [shape: bf16[72,4], index: 1, kind: input, shape index: {}]
  %s2 = inlined_call_operand.vmem [shape: f32[8,1], index: 2, kind: input, shape index: {}]
  %s3 = inlined_call_operand.hbm [shape: bf16[72,256], index: 3, kind: input, shape index: {}]
  %s4 = inlined_call_operand.vmem [shape: bf16[200,8], index: 4, kind: input, shape index: {}]
  %s5 = inlined_call_operand.vmem [shape: f32[8,1], index: 5, kind: input, shape index: {}]
  %s6 = inlined_call_operand.vmem [shape: bf16[200,256], index: 6, kind: input, shape index: {}]
  %s7 = inlined_call_operand.vmem [shape: bf16[200,8], index: 7, kind: input, shape index: {}]
  %s8 = inlined_call_operand.vmem [shape: f32[8,1], index: 8, kind: input, shape index: {}]
  %s9 = inlined_call_operand.vmem [shape: bf16[200,256], index: 9, kind: input, shape index: {}]
  %s10 = inlined_call_operand.vmem [shape: bf16[256,16], index: 10, kind: input, shape index: {}]
  %s11 = inlined_call_operand.vmem [shape: f32[2,8,16], index: 11, kind: output, shape index: {}]
  %s12 = sld [smem:[#allocation0]]
  $region81: #{hyper_encoder_pallas.1} parent=0
    _
  %s14 = ssub.s32 1, %s12
  %s15 = scalar_select 0, %s14, %s12
  $region1: #{hyper_encoder_pallas.1} parent=0
    #allocation2 [shape = 'u8[36864]{0}', space=vmem, size = 0x9000, scoped, tag = 'input window, operand 3, single buffered']
    #allocation3 [shape = 's32[2]{0}', space=sflag, size = 0x8, scoped, tag = 'scoped memory for hyper_encoder_pallas.1']
    %16 = vsyncpa [#allocation3], 0
    loop: start=0, step=1, limit=4
    $region2: #{hyper_encoder_pallas.1} parent=1 // loop_pre_header
      _
    $region3: #{hyper_encoder_pallas.1} parent=1 // loop_header
      %s18 = sphi 0, %s22
      %p19 = scmp.ge.s32.totalorder %s18, 4
      %s28 = sphi 0, %s30
      %s31 = sphi 0, %s28
      %s32 = sphi 0, %s31
      %s48 = sphi 0, %s32
      %s52 = sphi 0, %s52
      %s54 = sphi 0, %s52
      %s55 = sphi 0, %s54
      %s69 = sphi 0, %s55
      %s73 = sphi 0, %s73
      %s75 = sphi 0, %s73
      %s76 = sphi 0, %s75
      %s90 = sphi 0, %s76
      %s94 = sphi 0, %s94
      %s96 = sphi 0, %s94
      %s97 = sphi 0, %s96
      %s111 = sphi 0, %s97
      %s115 = sphi 0, %s115
      %s117 = sphi 0, %s115
      %s118 = sphi 0, %s117
      %s132 = sphi 0, %s118
      %s136 = sphi 0, %s136
      %s138 = sphi 0, %s136
      %s139 = sphi 0, %s138
      %s153 = sphi 0, %s139
      %s157 = sphi 0, %s157
      %s159 = sphi 0, %s157
      %s160 = sphi 0, %s159
      %s174 = sphi 0, %s160
      %s178 = sphi 0, %s178
      %s180 = sphi 0, %s178
      %s181 = sphi 0, %s180
      %s195 = sphi 0, %s181
      %s199 = sphi 0, %s199
      %s201 = sphi 0, %s199
      %s202 = sphi 0, %s201
      %s216 = sphi 0, %s202
      %s220 = sphi 0, %s220
      %s222 = sphi 0, %s220
      %s223 = sphi 0, %s222
      %s237 = sphi 0, %s223
      %s241 = sphi 0, %s241
      %s243 = sphi 0, %s241
      %s244 = sphi 0, %s243
      %s258 = sphi 0, %s244
      %s264 = sphi 0, %s266
      %s267 = sphi 0, %s264
      %s268 = sphi 0, %s267
      %s284 = sphi 0, %s268
    $region4: #{hyper_encoder_pallas.1} parent=1 // loop_header_branch
      %21 = sbr.rel (%p19) target = $region8
    $region5: #{hyper_encoder_pallas.1} parent=1 // loop_body
      %s23 = ssub.s32 %s18, 1
      %s24 = ssub.s32 %s18, 2
      %s25 = sadd.s32 %s18, 1
      %s26 = ssub.s32 %s18, %s25
      %p27 = scmp.eq.s32.totalorder %s26, 0
      %s29 = sadd.s32 %s28, 1
      %s30 = scalar_select %p27, %s28, %s29
      %p33 = pneg %p27
      %p34 = scmp.eq.s32.totalorder %s18, 1
      %p35 = por %p33, %p34
      %p36 = scmp.ne.s32.totalorder %s28, %s31
      %p37 = scmp.eq.s32.totalorder %s18, 0
      %p38 = por %p36, %p37
      %p39 = scmp.ne.s32.totalorder %s28, %s31
      %p40 = scmp.eq.s32.totalorder %s23, 1
      %p41 = por %p39, %p40
      %p42 = scmp.ne.s32.totalorder %s31, %s32
      %p43 = scmp.eq.s32.totalorder %s23, 0
      %p44 = por %p42, %p43
      %p45 = scmp.ne.s32.totalorder %s31, %s32
      %p46 = scmp.eq.s32.totalorder %s24, 1
      %p47 = por %p45, %p46
      %p49 = scmp.ne.s32.totalorder %s32, %s48
      %p50 = scmp.eq.s32.totalorder %s24, 0
      %p51 = por %p49, %p50
      %s53 = sadd.s32 %s52, 1
      %p56 = scmp.eq.s32.totalorder %s18, 1
      %p57 = scmp.ne.s32.totalorder %s52, %s54
      %p58 = scmp.eq.s32.totalorder %s18, 0
      %p59 = por %p57, %p58
      %p60 = scmp.ne.s32.totalorder %s52, %s54
      %p61 = scmp.eq.s32.totalorder %s23, 1
      %p62 = por %p60, %p61
      %p63 = scmp.ne.s32.totalorder %s54, %s55
      %p64 = scmp.eq.s32.totalorder %s23, 0
      %p65 = por %p63, %p64
      %p66 = scmp.ne.s32.totalorder %s54, %s55
      %p67 = scmp.eq.s32.totalorder %s24, 1
      %p68 = por %p66, %p67
      %p70 = scmp.ne.s32.totalorder %s55, %s69
      %p71 = scmp.eq.s32.totalorder %s24, 0
      %p72 = por %p70, %p71
      %s74 = sadd.s32 %s73, 1
      %p77 = scmp.eq.s32.totalorder %s18, 1
      %p78 = scmp.ne.s32.totalorder %s73, %s75
      %p79 = scmp.eq.s32.totalorder %s18, 0
      %p80 = por %p78, %p79
      %p81 = scmp.ne.s32.totalorder %s73, %s75
      %p82 = scmp.eq.s32.totalorder %s23, 1
      %p83 = por %p81, %p82
      %p84 = scmp.ne.s32.totalorder %s75, %s76
      %p85 = scmp.eq.s32.totalorder %s23, 0
      %p86 = por %p84, %p85
      %p87 = scmp.ne.s32.totalorder %s75, %s76
      %p88 = scmp.eq.s32.totalorder %s24, 1
      %p89 = por %p87, %p88
      %p91 = scmp.ne.s32.totalorder %s76, %s90
      %p92 = scmp.eq.s32.totalorder %s24, 0
      %p93 = por %p91, %p92
      %s95 = sadd.s32 %s94, 1
      %p98 = scmp.eq.s32.totalorder %s18, 1
      %p99 = scmp.ne.s32.totalorder %s94, %s96
      %p100 = scmp.eq.s32.totalorder %s18, 0
      %p101 = por %p99, %p100
      %p102 = scmp.ne.s32.totalorder %s94, %s96
      %p103 = scmp.eq.s32.totalorder %s23, 1
      %p104 = por %p102, %p103
      %p105 = scmp.ne.s32.totalorder %s96, %s97
      %p106 = scmp.eq.s32.totalorder %s23, 0
      %p107 = por %p105, %p106
      %p108 = scmp.ne.s32.totalorder %s96, %s97
      %p109 = scmp.eq.s32.totalorder %s24, 1
      %p110 = por %p108, %p109
      %p112 = scmp.ne.s32.totalorder %s97, %s111
      %p113 = scmp.eq.s32.totalorder %s24, 0
      %p114 = por %p112, %p113
      %s116 = sadd.s32 %s115, 1
      %p119 = scmp.eq.s32.totalorder %s18, 1
      %p120 = scmp.ne.s32.totalorder %s115, %s117
      %p121 = scmp.eq.s32.totalorder %s18, 0
      %p122 = por %p120, %p121
      %p123 = scmp.ne.s32.totalorder %s115, %s117
      %p124 = scmp.eq.s32.totalorder %s23, 1
      %p125 = por %p123, %p124
      %p126 = scmp.ne.s32.totalorder %s117, %s118
      %p127 = scmp.eq.s32.totalorder %s23, 0
      %p128 = por %p126, %p127
      %p129 = scmp.ne.s32.totalorder %s117, %s118
      %p130 = scmp.eq.s32.totalorder %s24, 1
      %p131 = por %p129, %p130
      %p133 = scmp.ne.s32.totalorder %s118, %s132
      %p134 = scmp.eq.s32.totalorder %s24, 0
      %p135 = por %p133, %p134
      %s137 = sadd.s32 %s136, 1
      %p140 = scmp.eq.s32.totalorder %s18, 1
      %p141 = scmp.ne.s32.totalorder %s136, %s138
      %p142 = scmp.eq.s32.totalorder %s18, 0
      %p143 = por %p141, %p142
      %p144 = scmp.ne.s32.totalorder %s136, %s138
      %p145 = scmp.eq.s32.totalorder %s23, 1
      %p146 = por %p144, %p145
      %p147 = scmp.ne.s32.totalorder %s138, %s139
      %p148 = scmp.eq.s32.totalorder %s23, 0
      %p149 = por %p147, %p148
      %p150 = scmp.ne.s32.totalorder %s138, %s139
      %p151 = scmp.eq.s32.totalorder %s24, 1
      %p152 = por %p150, %p151
      %p154 = scmp.ne.s32.totalorder %s139, %s153
      %p155 = scmp.eq.s32.totalorder %s24, 0
      %p156 = por %p154, %p155
      %s158 = sadd.s32 %s157, 1
      %p161 = scmp.eq.s32.totalorder %s18, 1
      %p162 = scmp.ne.s32.totalorder %s157, %s159
      %p163 = scmp.eq.s32.totalorder %s18, 0
      %p164 = por %p162, %p163
      %p165 = scmp.ne.s32.totalorder %s157, %s159
      %p166 = scmp.eq.s32.totalorder %s23, 1
      %p167 = por %p165, %p166
      %p168 = scmp.ne.s32.totalorder %s159, %s160
      %p169 = scmp.eq.s32.totalorder %s23, 0
      %p170 = por %p168, %p169
      %p171 = scmp.ne.s32.totalorder %s159, %s160
      %p172 = scmp.eq.s32.totalorder %s24, 1
      %p173 = por %p171, %p172
      %p175 = scmp.ne.s32.totalorder %s160, %s174
      %p176 = scmp.eq.s32.totalorder %s24, 0
      %p177 = por %p175, %p176
      %s179 = sadd.s32 %s178, 1
      %p182 = scmp.eq.s32.totalorder %s18, 1
      %p183 = scmp.ne.s32.totalorder %s178, %s180
      %p184 = scmp.eq.s32.totalorder %s18, 0
      %p185 = por %p183, %p184
      %p186 = scmp.ne.s32.totalorder %s178, %s180
      %p187 = scmp.eq.s32.totalorder %s23, 1
      %p188 = por %p186, %p187
      %p189 = scmp.ne.s32.totalorder %s180, %s181
      %p190 = scmp.eq.s32.totalorder %s23, 0
      %p191 = por %p189, %p190
      %p192 = scmp.ne.s32.totalorder %s180, %s181
      %p193 = scmp.eq.s32.totalorder %s24, 1
      %p194 = por %p192, %p193
      %p196 = scmp.ne.s32.totalorder %s181, %s195
      %p197 = scmp.eq.s32.totalorder %s24, 0
      %p198 = por %p196, %p197
      %s200 = sadd.s32 %s199, 1
      %p203 = scmp.eq.s32.totalorder %s18, 1
      %p204 = scmp.ne.s32.totalorder %s199, %s201
      %p205 = scmp.eq.s32.totalorder %s18, 0
      %p206 = por %p204, %p205
      %p207 = scmp.ne.s32.totalorder %s199, %s201
      %p208 = scmp.eq.s32.totalorder %s23, 1
      %p209 = por %p207, %p208
      %p210 = scmp.ne.s32.totalorder %s201, %s202
      %p211 = scmp.eq.s32.totalorder %s23, 0
      %p212 = por %p210, %p211
      %p213 = scmp.ne.s32.totalorder %s201, %s202
      %p214 = scmp.eq.s32.totalorder %s24, 1
      %p215 = por %p213, %p214
      %p217 = scmp.ne.s32.totalorder %s202, %s216
      %p218 = scmp.eq.s32.totalorder %s24, 0
      %p219 = por %p217, %p218
      %s221 = sadd.s32 %s220, 1
      %p224 = scmp.eq.s32.totalorder %s18, 1
      %p225 = scmp.ne.s32.totalorder %s220, %s222
      %p226 = scmp.eq.s32.totalorder %s18, 0
      %p227 = por %p225, %p226
      %p228 = scmp.ne.s32.totalorder %s220, %s222
      %p229 = scmp.eq.s32.totalorder %s23, 1
      %p230 = por %p228, %p229
      %p231 = scmp.ne.s32.totalorder %s222, %s223
      %p232 = scmp.eq.s32.totalorder %s23, 0
      %p233 = por %p231, %p232
      %p234 = scmp.ne.s32.totalorder %s222, %s223
      %p235 = scmp.eq.s32.totalorder %s24, 1
      %p236 = por %p234, %p235
      %p238 = scmp.ne.s32.totalorder %s223, %s237
      %p239 = scmp.eq.s32.totalorder %s24, 0
      %p240 = por %p238, %p239
      %s242 = sadd.s32 %s241, 1
      %p245 = scmp.eq.s32.totalorder %s18, 1
      %p246 = scmp.ne.s32.totalorder %s241, %s243
      %p247 = scmp.eq.s32.totalorder %s18, 0
      %p248 = por %p246, %p247
      %p249 = scmp.ne.s32.totalorder %s241, %s243
      %p250 = scmp.eq.s32.totalorder %s23, 1
      %p251 = por %p249, %p250
      %p252 = scmp.ne.s32.totalorder %s243, %s244
      %p253 = scmp.eq.s32.totalorder %s23, 0
      %p254 = por %p252, %p253
      %p255 = scmp.ne.s32.totalorder %s243, %s244
      %p256 = scmp.eq.s32.totalorder %s24, 1
      %p257 = por %p255, %p256
      %p259 = scmp.ne.s32.totalorder %s244, %s258
      %p260 = scmp.eq.s32.totalorder %s24, 0
      %p261 = por %p259, %p260
      %s262 = ssub.s32 %s18, %s25
      %p263 = scmp.eq.s32.totalorder %s262, 0
      %s265 = sadd.s32 %s264, 1
      %s266 = scalar_select %p263, %s264, %s265
      %p269 = pneg %p263
      %p270 = scmp.eq.s32.totalorder %s18, 1
      %p271 = por %p269, %p270
      %p272 = scmp.ne.s32.totalorder %s264, %s267
      %p273 = scmp.eq.s32.totalorder %s18, 0
      %p274 = por %p272, %p273
      %p275 = scmp.ne.s32.totalorder %s264, %s267
      %p276 = scmp.eq.s32.totalorder %s23, 1
      %p277 = por %p275, %p276
      %p278 = scmp.ne.s32.totalorder %s267, %s268
      %p279 = scmp.eq.s32.totalorder %s23, 0
      %p280 = por %p278, %p279
      %p281 = scmp.ne.s32.totalorder %s267, %s268
      %p282 = scmp.eq.s32.totalorder %s24, 1
      %p283 = por %p281, %p282
      %p285 = scmp.ne.s32.totalorder %s268, %s284
      %p286 = scmp.eq.s32.totalorder %s24, 0
      %p287 = por %p285, %p286
      %p288 = scmp.le.s32.totalorder 1, %s18
      %p289 = scmp.lt.s32.totalorder %s18, 3
      %p290 = pnand %p288, %p289
      %p291 = pneg %p290
      // Predicated region
      $region9: #{hyper_encoder_pallas.1} parent=5 // pred_check
        _
      $region10: #{hyper_encoder_pallas.1} parent=5 // pred_check_branch
        %293 = sbr.rel (%p290) target = $region12
      $region11: #{hyper_encoder_pallas.1} parent=5 // pred_region
        %s294 = ssub.s32 %s18, 1
        // Predicated region
        $region13: #{hyper_encoder_pallas.1} parent=11 // pred_check
          %p295 = pneg %p65
        $region14: #{hyper_encoder_pallas.1} parent=11 // pred_check_branch
          %297 = sbr.rel (%p295) target = $region16
        $region15: #{hyper_encoder_pallas.1} parent=11 // pred_region
          _
        $region16: #{hyper_encoder_pallas.1} parent=11 // pred_fallthru
          _
        // Predicated region
        $region17: #{hyper_encoder_pallas.1} parent=11 // pred_check
          %p298 = pneg %p86
        $region18: #{hyper_encoder_pallas.1} parent=11 // pred_check_branch
          %300 = sbr.rel (%p298) target = $region20
        $region19: #{hyper_encoder_pallas.1} parent=11 // pred_region
          _
        $region20: #{hyper_encoder_pallas.1} parent=11 // pred_fallthru
          _
        // Predicated region
        $region21: #{hyper_encoder_pallas.1} parent=11 // pred_check
          %p301 = pneg %p107
        $region22: #{hyper_encoder_pallas.1} parent=11 // pred_check_branch
          %303 = sbr.rel (%p301) target = $region24
        $region23: #{hyper_encoder_pallas.1} parent=11 // pred_region
          %s305 = ssub.s32 1152, 1152
          %306 = vsyncadd [#allocation3], %s305
          %s307 = sshll.u32 [#allocation2], 4
          %s308 = int_to_ptr.vmem [resolvable:$true] %s307
          %313 = dma.hbm_to_vmem [thread:$0]  %s3, 1152, %s308, [#allocation3], 128, 128, 8
        $region24: #{hyper_encoder_pallas.1} parent=11 // pred_fallthru
          _
        // Predicated region
        $region25: #{hyper_encoder_pallas.1} parent=11 // pred_check
          %p314 = pneg %p128
        $region26: #{hyper_encoder_pallas.1} parent=11 // pred_check_branch
          %316 = sbr.rel (%p314) target = $region28
        $region27: #{hyper_encoder_pallas.1} parent=11 // pred_region
          _
        $region28: #{hyper_encoder_pallas.1} parent=11 // pred_fallthru
          _
        // Predicated region
        $region29: #{hyper_encoder_pallas.1} parent=11 // pred_check
          %p317 = pneg %p149
        $region30: #{hyper_encoder_pallas.1} parent=11 // pred_check_branch
          %319 = sbr.rel (%p317) target = $region32
        $region31: #{hyper_encoder_pallas.1} parent=11 // pred_region
          _
        $region32: #{hyper_encoder_pallas.1} parent=11 // pred_fallthru
          _
        // Predicated region
        $region33: #{hyper_encoder_pallas.1} parent=11 // pred_check
          %p320 = pneg %p170
        $region34: #{hyper_encoder_pallas.1} parent=11 // pred_check_branch
          %322 = sbr.rel (%p320) target = $region36
        $region35: #{hyper_encoder_pallas.1} parent=11 // pred_region
          _
        $region36: #{hyper_encoder_pallas.1} parent=11 // pred_fallthru
          _
        // Predicated region
        $region37: #{hyper_encoder_pallas.1} parent=11 // pred_check
          %p323 = pneg %p191
        $region38: #{hyper_encoder_pallas.1} parent=11 // pred_check_branch
          %325 = sbr.rel (%p323) target = $region40
        $region39: #{hyper_encoder_pallas.1} parent=11 // pred_region
          _
        $region40: #{hyper_encoder_pallas.1} parent=11 // pred_fallthru
          _
        // Predicated region
        $region41: #{hyper_encoder_pallas.1} parent=11 // pred_check
          %p326 = pneg %p212
        $region42: #{hyper_encoder_pallas.1} parent=11 // pred_check_branch
          %328 = sbr.rel (%p326) target = $region44
        $region43: #{hyper_encoder_pallas.1} parent=11 // pred_region
          _
        $region44: #{hyper_encoder_pallas.1} parent=11 // pred_fallthru
          _
        // Predicated region
        $region45: #{hyper_encoder_pallas.1} parent=11 // pred_check
          %p329 = pneg %p233
        $region46: #{hyper_encoder_pallas.1} parent=11 // pred_check_branch
          %331 = sbr.rel (%p329) target = $region48
        $region47: #{hyper_encoder_pallas.1} parent=11 // pred_region
          _
        $region48: #{hyper_encoder_pallas.1} parent=11 // pred_fallthru
          _
        // Predicated region
        $region49: #{hyper_encoder_pallas.1} parent=11 // pred_check
          %p332 = pneg %p254
        $region50: #{hyper_encoder_pallas.1} parent=11 // pred_check_branch
          %334 = sbr.rel (%p332) target = $region52
        $region51: #{hyper_encoder_pallas.1} parent=11 // pred_region
          _
        $region52: #{hyper_encoder_pallas.1} parent=11 // pred_fallthru
          _
      $region12: #{hyper_encoder_pallas.1} parent=5 // pred_fallthru
        _
      %p335 = scmp.lt.s32.totalorder %s18, 2
      // Predicated region
      $region53: #{hyper_encoder_pallas.1} parent=5 // pred_check
        %p336 = pneg %p335
      $region54: #{hyper_encoder_pallas.1} parent=5 // pred_check_branch
        %338 = sbr.rel (%p336) target = $region56
      $region55: #{hyper_encoder_pallas.1} parent=5 // pred_region
        // Predicated region
        $region57: #{hyper_encoder_pallas.1} parent=55 // pred_check
          %p339 = pneg %p38
        $region58: #{hyper_encoder_pallas.1} parent=55 // pred_check_branch
          %341 = sbr.rel (%p339) target = $region60
        $region59: #{hyper_encoder_pallas.1} parent=55 // pred_region
          %p342 = scmp.lt.s32.totalorder %s18, 1
          %s343 = scalar_select %p342, %s18, 1
          %s344 = smul.addr %s343, 2
          %s345 = smul.addr %s344, 4
          %s346 = scalar_lea.vmem %s0, %s345
        $region60: #{hyper_encoder_pallas.1} parent=55 // pred_fallthru
          _
      $region56: #{hyper_encoder_pallas.1} parent=5 // pred_fallthru
        _
      %p347 = scmp.le.s32.totalorder 1, %s18
      %p348 = scmp.lt.s32.totalorder %s18, 3
      %p349 = pnand %p347, %p348
      %p350 = pneg %p349
      // Predicated region
      $region61: #{hyper_encoder_pallas.1} parent=5 // pred_check
        _
      $region62: #{hyper_encoder_pallas.1} parent=5 // pred_check_branch
        %352 = sbr.rel (%p349) target = $region64
      $region63: #{hyper_encoder_pallas.1} parent=5 // pred_region
        %s353 = ssub.s32 %s18, 1
        // Predicated region
        $region65: #{hyper_encoder_pallas.1} parent=63 // pred_check
          %p354 = pneg %p107
        $region66: #{hyper_encoder_pallas.1} parent=63 // pred_check_branch
          %356 = sbr.rel (%p354) target = $region68
        $region67: #{hyper_encoder_pallas.1} parent=63 // pred_region
          %357 = dma.done [#allocation3], 1152
        $region68: #{hyper_encoder_pallas.1} parent=63 // pred_fallthru
          _
        %p358 = scmp.lt.s32.totalorder %s23, 1
        %s359 = scalar_select %p358, %s23, 1
        %s360 = smul.addr %s359, 2
        %s361 = smul.addr %s360, 4
        %s362 = scalar_lea.vmem %s0, %s361
        %p363 = pneg %p44
        %p364 = pneg %p41
        %p365 = pneg %p65
        %p366 = pneg %p62
        %p367 = pneg %p86
        %p368 = pneg %p83
        %p369 = pneg %p107
        %p370 = pneg %p104
        %p371 = pneg %p128
        %p372 = pneg %p125
        %p373 = pneg %p149
        %p374 = pneg %p146
        %p375 = pneg %p170
        %p376 = pneg %p167
        %p377 = pneg %p191
        %p378 = pneg %p188
        %p379 = pneg %p212
        %p380 = pneg %p209
        %p381 = pneg %p233
        %p382 = pneg %p230
        %p383 = pneg %p254
        %p384 = pneg %p251
        %p385 = pneg %p280
        %p386 = pneg %p277
        %p387 = scmp.lt.s32.totalorder %s23, 1
        %s388 = scalar_select %p387, %s23, 1
        %s389 = smul.addr %s388, 8
        %s390 = scalar_lea.vmem %s11, %s389
        %p391 = scmp.lt.s32.totalorder %s23, 1
        %s392 = scalar_select %p391, %s23, 1
        %s393 = smul.addr %s392, 2
        %s394 = smul.addr %s393, 4
        %s395 = scalar_lea.vmem %s0, %s394
        %p396 = scmp.lt.s32.totalorder %s23, 1
        %s397 = scalar_select %p396, %s23, 1
        %s398 = smul.addr %s397, 8
        %s399 = scalar_lea.vmem %s11, %s398
        %v401 = vld [vmem:[%s395] sm:$0xff]
        %v402 = vand.u32 2147483647, %v401
        %v404 = vcombine.high %v402, %v402
        %v406 = vpack.c.bf16 %v402, %v402
        %v407 = vpack.c.bf16 %v404, %v404
        %v408 = vld [vmem:[%s1] sm:$0xf]
        %v409 = vld [vmem:[%s1 + $0x4] sm:$0xf]
        %v410 = vld [vmem:[%s1 + $0x8] sm:$0xf]
        %v411 = vld [vmem:[%s1 + $0xc] sm:$0xf]
        %v412 = vld [vmem:[%s1 + $0x10] sm:$0xf]
        %v413 = vld [vmem:[%s1 + $0x14] sm:$0xf]
        %v414 = vld [vmem:[%s1 + $0x18] sm:$0xf]
        %v415 = vld [vmem:[%s1 + $0x1c] sm:$0xf]
        %v416 = vld [vmem:[%s1 + $0x20] sm:$0xf]
        %v426 = vunpack.c.l.b16 %v408
        %v427 = vunpack.c.l.b16 %v409
        %v428 = vunpack.c.l.b16 %v410
        %v429 = vunpack.c.l.b16 %v411
        %v430 = vunpack.c.l.b16 %v412
        %v431 = vunpack.c.l.b16 %v413
        %v432 = vunpack.c.l.b16 %v414
        %v433 = vunpack.c.l.b16 %v415
        %v434 = vunpack.c.l.b16 %v416
        %v435 = vpack.c.b16 %v427, %v426
        %v436 = vpack.c.b16 %v429, %v428
        %v437 = vpack.c.b16 %v431, %v430
        %v438 = vpack.c.b16 %v433, %v432
        %v439 = vpack.c.b16 %v434, %v434
        %vm440 = vcmask 31744
        %v442 = vsel %vm440, %v435, 0
        %v445 = vsel %vm440, %v436, 0
        %v448 = vsel %vm440, %v437, 0
        %v451 = vsel %vm440, %v438, 0
        %v454 = vsel %vm440, %v439, 0
        %vm456 = vcmask 1041408
        %v458 = vsel %vm456, %v406, 0
        %v461 = vsel %vm456, %v407, 0
        %463 = vmatprep.subr.bf16.mxu0 %v461
        %464 = vmatpush1.bf16.msra.mxu0 %v458
        %465 = vmatprep.subr.bf16.mxu0 0
        %466 = vmatpush1.bf16.msra.mxu0 0
        %467 = vmatprep.subr.bf16.mxu0 0
        %468 = vmatpush1.bf16.msra.mxu0 0
        %469 = vmatprep.subr.bf16.mxu0 0
        %470 = vmatpush1.bf16.msra.mxu0 0
        %471 = vmatprep.subr.bf16.mxu0 0
        %472 = vmatpush1.bf16.msra.mxu0 0
        %473 = vmatprep.subr.bf16.mxu0 0
        %474 = vmatpush1.bf16.msra.mxu0 0
        %475 = vmatprep.subr.bf16.mxu0 0
        %476 = vmatpush1.bf16.msra.mxu0 0
        %477 = vmatprep.subr.bf16.mxu0 0
        %478 = vmatpush1.bf16.msra.mxu0 0
        %479 = vmatprep.subr.bf16.mxu0 0
        %480 = vmatpush1.bf16.msra.mxu0 0
        %481 = vmatprep.subr.bf16.mxu0 0
        %482 = vmatpush1.bf16.msra.mxu0 0
        %483 = vmatprep.subr.bf16.mxu0 0
        %484 = vmatpush1.bf16.msra.mxu0 0
        %485 = vmatprep.subr.bf16.mxu0 0
        %486 = vmatpush1.bf16.msra.mxu0 0
        %487 = vmatprep.subr.bf16.mxu0 0
        %488 = vmatpush1.bf16.msra.mxu0 0
        %489 = vmatprep.subr.bf16.mxu0 0
        %490 = vmatpush1.bf16.msra.mxu0 0
        %491 = vmatprep.subr.bf16.mxu0 0
        %492 = vmatpush1.bf16.msra.mxu0 0
        %493 = vmatprep.subr.bf16.mxu0 0
        %494 = vmatpush1.bf16.msra.mxu0 0
        %495 = vmatprep.mubr.bf16.mxu0 0
        %496 = vmatmul.mubr.bf16.gmra.mrb[0].mxu0 %v442
        %v497 = vpop.f32.mrb[0].mxu0
        %v498 = vadd.f32 0.0, %v497
        %v499 = vpop.f32.mrb[0].mxu0
        %v500 = vadd.f32 0.0, %v499
        %v501 = vpop.f32.mrb[0].mxu0
        %v502 = vadd.f32 0.0, %v501
        %v503 = vpop.f32.mrb[0].mxu0
        %v504 = vadd.f32 0.0, %v503
        %505 = vmatprep.mubr.bf16.mxu0 0
        %506 = vmatmul.mubr.bf16.gmra.mrb[0].mxu0 %v445
        %v507 = vpop.f32.mrb[0].mxu0
        %v508 = vadd.f32 0.0, %v507
        %v509 = vpop.f32.mrb[0].mxu0
        %v510 = vadd.f32 0.0, %v509
        %v511 = vpop.f32.mrb[0].mxu0
        %v512 = vadd.f32 0.0, %v511
        %v513 = vpop.f32.mrb[0].mxu0
        %v514 = vadd.f32 0.0, %v513
        %515 = vmatprep.mubr.bf16.mxu0 0
        %516 = vmatmul.mubr.bf16.gmra.mrb[0].mxu0 %v448
        %v517 = vpop.f32.mrb[0].mxu0
        %v518 = vadd.f32 0.0, %v517
        %v519 = vpop.f32.mrb[0].mxu0
        %v520 = vadd.f32 0.0, %v519
        %v521 = vpop.f32.mrb[0].mxu0
        %v522 = vadd.f32 0.0, %v521
        %v523 = vpop.f32.mrb[0].mxu0
        %v524 = vadd.f32 0.0, %v523
        %525 = vmatprep.mubr.bf16.mxu0 0
        %526 = vmatmul.mubr.bf16.gmra.mrb[0].mxu0 %v451
        %v527 = vpop.f32.mrb[0].mxu0
        %v528 = vadd.f32 0.0, %v527
        %v529 = vpop.f32.mrb[0].mxu0
        %v530 = vadd.f32 0.0, %v529
        %v531 = vpop.f32.mrb[0].mxu0
        %v532 = vadd.f32 0.0, %v531
        %v533 = vpop.f32.mrb[0].mxu0
        %v534 = vadd.f32 0.0, %v533
        %535 = vmatprep.mubr.bf16.mxu0 0
        %536 = vmatmul.mubr.bf16.gmra.mrb[0].mxu0 %v454
        %v537 = vpop.f32.mrb[0].mxu0
        %v538 = vadd.f32 0.0, %v537
        %v539 = vpop.f32.mrb[0].mxu0
        %v540 = vadd.f32 0.0, %v539
        %v541 = vpop.f32.mrb[0].mxu0
        %v542 = vpop.f32.mrb[0].mxu0
        %543 = vdwg.mxu0
        %v544 = vld [vmem:[#allocation2] sm:$0xff]
        %v545 = vld [vmem:[#allocation2 + $0x8] sm:$0xff]
        %v546 = vld [vmem:[#allocation2 + $0x10] sm:$0xff]
        %v547 = vld [vmem:[#allocation2 + $0x18] sm:$0xff]
        %v548 = vld [vmem:[#allocation2 + $0x20] sm:$0xff]
        %v549 = vld [vmem:[#allocation2 + $0x28] sm:$0xff]
        %v550 = vld [vmem:[#allocation2 + $0x30] sm:$0xff]
        %v551 = vld [vmem:[#allocation2 + $0x38] sm:$0xff]
        %v552 = vld [vmem:[#allocation2 + $0x40] sm:$0xff]
        %v553 = vunpack.c.l.bf16 %v544
        %v554 = vunpack.c.h.bf16 %v544
        %v555 = vunpack.c.l.bf16 %v545
        %v556 = vunpack.c.h.bf16 %v545
        %v557 = vunpack.c.l.bf16 %v546
        %v558 = vunpack.c.h.bf16 %v546
        %v559 = vunpack.c.l.bf16 %v547
        %v560 = vunpack.c.h.bf16 %v547
        %v561 = vunpack.c.l.bf16 %v548
        %v562 = vunpack.c.h.bf16 %v548
        %v563 = vunpack.c.l.bf16 %v549
        %v564 = vunpack.c.h.bf16 %v549
        %v565 = vunpack.c.l.bf16 %v550
        %v566 = vunpack.c.h.bf16 %v550
        %v567 = vunpack.c.l.bf16 %v551
        %v568 = vunpack.c.h.bf16 %v551
        %v569 = vunpack.c.l.bf16 %v552
        %v570 = vunpack.c.h.bf16 %v552
        %v571 = vmul.f32 %v498, %v553
        %v572 = vmul.f32 %v500, %v554
        %v573 = vmul.f32 %v502, %v555
        %v574 = vmul.f32 %v504, %v556
        %v575 = vmul.f32 %v508, %v557
        %v576 = vmul.f32 %v510, %v558
        %v577 = vmul.f32 %v512, %v559
        %v578 = vmul.f32 %v514, %v560
        %v579 = vmul.f32 %v518, %v561
        %v580 = vmul.f32 %v520, %v562
        %v581 = vmul.f32 %v522, %v563
        %v582 = vmul.f32 %v524, %v564
        %v583 = vmul.f32 %v528, %v565
        %v584 = vmul.f32 %v530, %v566
        %v585 = vmul.f32 %v532, %v567
        %v586 = vmul.f32 %v534, %v568
        %v587 = vmul.f32 %v538, %v569
        %v588 = vmul.f32 %v540, %v570
        %589 = vrot.lane.b32.xlu0 %v571, 17
        %v590 = vpop.permute.xlu0 %589
        %591 = vrot.lane.b32.xlu0 %v572, 17
        %v592 = vpop.permute.xlu0 %591
        %v593 = vlaneseq
        %v594 = vand.u32 %v593, 127
        %vm595 = vcmp.lt.s32.totalorder %v594, 17
        %v596 = vsel %vm595, %v590, %v592
        %v597 = vsel %vm595, %v592, %v590
        %v598 = vadd.f32 %v597, 0.0
        %v599 = vadd.f32 %v596, 0.0
        %600 = vrot.lane.b32.xlu0 %v573, 16
        %v601 = vpop.permute.xlu0 %600
        %602 = vrot.lane.b32.xlu0 %v574, 16
        %v603 = vpop.permute.xlu0 %602
        %vm604 = vcmp.lt.s32.totalorder %v594, 16
        %v605 = vsel %vm604, %v601, %v603
        %v606 = vsel %vm604, %v603, %v601
        %v607 = vadd.f32 %v598, %v606
        %v608 = vadd.f32 %v599, %v605
        %609 = vrot.lane.b32.xlu0 %v575, 15
        %v610 = vpop.permute.xlu0 %609
        %611 = vrot.lane.b32.xlu0 %v576, 15
        %v612 = vpop.permute.xlu0 %611
        %vm613 = vcmp.lt.s32.totalorder %v594, 15
        %v614 = vsel %vm613, %v610, %v612
        %v615 = vsel %vm613, %v612, %v610
        %v616 = vadd.f32 %v607, %v615
        %v617 = vadd.f32 %v608, %v614
        %618 = vrot.lane.b32.xlu0 %v577, 1
        %v619 = vpop.permute.xlu0 %618
        %620 = vrot.lane.b32.xlu0 %v578, 1
        %v621 = vpop.permute.xlu0 %620
        %vm622 = vcmp.lt.s32.totalorder %v594, 1
        %v623 = vsel %vm622, %v619, %v621
        %v624 = vsel %vm622, %v621, %v619
        %v625 = vadd.f32 %v616, %v624
        %v626 = vadd.f32 %v617, %v623
        %v627 = vadd.f32 %v625, %v579
        %v628 = vadd.f32 %v626, %v580
        %629 = vrot.lane.b32.xlu0 %v581, 127
        %v630 = vpop.permute.xlu0 %629
        %631 = vrot.lane.b32.xlu0 %v582, 127
        %v632 = vpop.permute.xlu0 %631
        %vm633 = vcmp.lt.s32.totalorder %v594, 127
        %v634 = vsel %vm633, %v630, %v632
        %v635 = vsel %vm633, %v632, %v630
        %v636 = vadd.f32 %v627, %v634
        %v637 = vadd.f32 %v628, %v635
        %638 = vrot.lane.b32.xlu0 %v583, 113
        %v639 = vpop.permute.xlu0 %638
        %640 = vrot.lane.b32.xlu0 %v584, 113
        %v641 = vpop.permute.xlu0 %640
        %vm642 = vcmp.lt.s32.totalorder %v594, 113
        %v643 = vsel %vm642, %v639, %v641
        %v644 = vsel %vm642, %v641, %v639
        %v645 = vadd.f32 %v636, %v643
        %v646 = vadd.f32 %v637, %v644
        %647 = vrot.lane.b32.xlu0 %v585, 112
        %v648 = vpop.permute.xlu0 %647
        %649 = vrot.lane.b32.xlu0 %v586, 112
        %v650 = vpop.permute.xlu0 %649
        %vm651 = vcmp.lt.s32.totalorder %v594, 112
        %v652 = vsel %vm651, %v648, %v650
        %v653 = vsel %vm651, %v650, %v648
        %v654 = vadd.f32 %v645, %v652
        %v655 = vadd.f32 %v646, %v653
        %656 = vrot.lane.b32.xlu0 %v587, 111
        %v657 = vpop.permute.xlu0 %656
        %658 = vrot.lane.b32.xlu0 %v588, 111
        %v659 = vpop.permute.xlu0 %658
        %vm660 = vcmp.lt.s32.totalorder %v594, 111
        %v661 = vsel %vm660, %v657, %v659
        %v662 = vsel %vm660, %v659, %v657
        %v663 = vadd.f32 %v654, %v661
        %v664 = vadd.f32 %v655, %v662
        %v665 = vld [vmem:[%s2] sm:$0xff]
        %667 = vset.pattern.permute.xlu0 0
        %668 = vperm.xlu0 %667, %v665
        %v669 = vpop.permute.xlu0 %668
        %v671 = vadd.f32 %v663, %v669
        %v672 = vadd.f32 %v664, %v669
        %v673 = vmax.f32 %v671, 0.0
        %v674 = vmax.f32 %v672, 0.0
        %v675 = vpack.c.bf16 %v673, %v673
        %v676 = vpack.c.bf16 %v674, %v674
        %v677 = vld [vmem:[%s4] sm:$0xf]
        %v678 = vld [vmem:[%s4 + $0x4] sm:$0xf]
        %v679 = vld [vmem:[%s4 + $0x8] sm:$0xf]
        %v680 = vld [vmem:[%s4 + $0xc] sm:$0xf]
        %v681 = vld [vmem:[%s4 + $0x10] sm:$0xf]
        %v682 = vld [vmem:[%s4 + $0x14] sm:$0xf]
        %v683 = vld [vmem:[%s4 + $0x18] sm:$0xf]
        %v684 = vld [vmem:[%s4 + $0x1c] sm:$0xf]
        %v685 = vld [vmem:[%s4 + $0x20] sm:$0xf]
        %v686 = vld [vmem:[%s4 + $0x24] sm:$0xf]
        %v687 = vld [vmem:[%s4 + $0x28] sm:$0xf]
        %v688 = vld [vmem:[%s4 + $0x2c] sm:$0xf]
        %v689 = vld [vmem:[%s4 + $0x30] sm:$0xf]
        %v690 = vld [vmem:[%s4 + $0x34] sm:$0xf]
        %v691 = vld [vmem:[%s4 + $0x38] sm:$0xf]
        %v692 = vld [vmem:[%s4 + $0x3c] sm:$0xf]
        %v693 = vld [vmem:[%s4 + $0x40] sm:$0xf]
        %v694 = vld [vmem:[%s4 + $0x44] sm:$0xf]
        %v695 = vld [vmem:[%s4 + $0x48] sm:$0xf]
        %v696 = vld [vmem:[%s4 + $0x4c] sm:$0xf]
        %v697 = vld [vmem:[%s4 + $0x50] sm:$0xf]
        %v698 = vld [vmem:[%s4 + $0x54] sm:$0xf]
        %v699 = vld [vmem:[%s4 + $0x58] sm:$0xf]
        %v700 = vld [vmem:[%s4 + $0x5c] sm:$0xf]
        %v701 = vld [vmem:[%s4 + $0x60] sm:$0xf]
        %v727 = vunpack.c.l.b16 %v677
        %v728 = vunpack.c.l.b16 %v678
        %v729 = vunpack.c.l.b16 %v679
        %v730 = vunpack.c.l.b16 %v680
        %v731 = vunpack.c.l.b16 %v681
        %v732 = vunpack.c.l.b16 %v682
        %v733 = vunpack.c.l.b16 %v683
        %v734 = vunpack.c.l.b16 %v684
        %v735 = vunpack.c.l.b16 %v685
        %v736 = vunpack.c.l.b16 %v686
        %v737 = vunpack.c.l.b16 %v687
        %v738 = vunpack.c.l.b16 %v688
        %v739 = vunpack.c.l.b16 %v689
        %v740 = vunpack.c.l.b16 %v690
        %v741 = vunpack.c.l.b16 %v691
        %v742 = vunpack.c.l.b16 %v692
        %v743 = vunpack.c.l.b16 %v693
        %v744 = vunpack.c.l.b16 %v694
        %v745 = vunpack.c.l.b16 %v695
        %v746 = vunpack.c.l.b16 %v696
        %v747 = vunpack.c.l.b16 %v697
        %v748 = vunpack.c.l.b16 %v698
        %v749 = vunpack.c.l.b16 %v699
        %v750 = vunpack.c.l.b16 %v700
        %v751 = vunpack.c.l.b16 %v701
        %v752 = vpack.c.b16 %v728, %v727
        %v753 = vpack.c.b16 %v730, %v729
        %v754 = vpack.c.b16 %v732, %v731
        %v755 = vpack.c.b16 %v734, %v733
        %v756 = vpack.c.b16 %v736, %v735
        %v757 = vpack.c.b16 %v738, %v737
        %v758 = vpack.c.b16 %v740, %v739
        %v759 = vpack.c.b16 %v742, %v741
        %v760 = vpack.c.b16 %v744, %v743
        %v761 = vpack.c.b16 %v746, %v745
        %v762 = vpack.c.b16 %v748, %v747
        %v763 = vpack.c.b16 %v750, %v749
        %v764 = vpack.c.b16 %v751, %v751
        %vm765 = vcmask 64512
        %v767 = vsel %vm765, %v752, 0
        %v770 = vsel %vm765, %v753, 0
        %v773 = vsel %vm765, %v754, 0
        %v776 = vsel %vm765, %v755, 0
        %v779 = vsel %vm765, %v756, 0
        %v782 = vsel %vm765, %v757, 0
        %v785 = vsel %vm765, %v758, 0
        %v788 = vsel %vm765, %v759, 0
        %v791 = vsel %vm765, %v760, 0
        %v794 = vsel %vm765, %v761, 0
        %v797 = vsel %vm765, %v762, 0
        %v800 = vsel %vm765, %v763, 0
        %v803 = vsel %vm765, %v764, 0
        %vm805 = vcmask 1043456
        %v807 = vsel %vm805, %v675, 0
        %v810 = vsel %vm805, %v676, 0
        %812 = vmatprep.subr.bf16.mxu0 %v810
        %813 = vmatpush1.bf16.msra.mxu0 %v807
        %814 = vmatprep.subr.bf16.mxu0 0
        %815 = vmatpush1.bf16.msra.mxu0 0
        %816 = vmatprep.subr.bf16.mxu0 0
        %817 = vmatpush1.bf16.msra.mxu0 0
        %818 = vmatprep.subr.bf16.mxu0 0
        %819 = vmatpush1.bf16.msra.mxu0 0
        %820 = vmatprep.subr.bf16.mxu0 0
        %821 = vmatpush1.bf16.msra.mxu0 0
        %822 = vmatprep.subr.bf16.mxu0 0
        %823 = vmatpush1.bf16.msra.mxu0 0
        %824 = vmatprep.subr.bf16.mxu0 0
        %825 = vmatpush1.bf16.msra.mxu0 0
        %826 = vmatprep.subr.bf16.mxu0 0
        %827 = vmatpush1.bf16.msra.mxu0 0
        %828 = vmatprep.subr.bf16.mxu0 0
        %829 = vmatpush1.bf16.msra.mxu0 0
        %830 = vmatprep.subr.bf16.mxu0 0
        %831 = vmatpush1.bf16.msra.mxu0 0
        %832 = vmatprep.subr.bf16.mxu0 0
        %833 = vmatpush1.bf16.msra.mxu0 0
        %834 = vmatprep.subr.bf16.mxu0 0
        %835 = vmatpush1.bf16.msra.mxu0 0
        %836 = vmatprep.subr.bf16.mxu0 0
        %837 = vmatpush1.bf16.msra.mxu0 0
        %838 = vmatprep.subr.bf16.mxu0 0
        %839 = vmatpush1.bf16.msra.mxu0 0
        %840 = vmatprep.subr.bf16.mxu0 0
        %841 = vmatpush1.bf16.msra.mxu0 0
        %842 = vmatprep.subr.bf16.mxu0 0
        %843 = vmatpush1.bf16.msra.mxu0 0
        %844 = vmatprep.mubr.bf16.mxu0 0
        %845 = vmatmul.mubr.bf16.gmra.mrb[0].mxu0 %v767
        %v846 = vpop.f32.mrb[0].mxu0
        %v847 = vadd.f32 0.0, %v846
        %v848 = vpop.f32.mrb[0].mxu0
        %v849 = vadd.f32 0.0, %v848
        %v850 = vpop.f32.mrb[0].mxu0
        %v851 = vadd.f32 0.0, %v850
        %v852 = vpop.f32.mrb[0].mxu0
        %v853 = vadd.f32 0.0, %v852
        %854 = vmatprep.mubr.bf16.mxu0 0
        %855 = vmatmul.mubr.bf16.gmra.mrb[0].mxu0 %v770
        %v856 = vpop.f32.mrb[0].mxu0
        %v857 = vadd.f32 0.0, %v856
        %v858 = vpop.f32.mrb[0].mxu0
        %v859 = vadd.f32 0.0, %v858
        %v860 = vpop.f32.mrb[0].mxu0
        %v861 = vadd.f32 0.0, %v860
        %v862 = vpop.f32.mrb[0].mxu0
        %v863 = vadd.f32 0.0, %v862
        %864 = vmatprep.mubr.bf16.mxu0 0
        %865 = vmatmul.mubr.bf16.gmra.mrb[0].mxu0 %v773
        %v866 = vpop.f32.mrb[0].mxu0
        %v867 = vadd.f32 0.0, %v866
        %v868 = vpop.f32.mrb[0].mxu0
        %v869 = vadd.f32 0.0, %v868
        %v870 = vpop.f32.mrb[0].mxu0
        %v871 = vadd.f32 0.0, %v870
        %v872 = vpop.f32.mrb[0].mxu0
        %v873 = vadd.f32 0.0, %v872
        %874 = vmatprep.mubr.bf16.mxu0 0
        %875 = vmatmul.mubr.bf16.gmra.mrb[0].mxu0 %v776
        %v876 = vpop.f32.mrb[0].mxu0
        %v877 = vadd.f32 0.0, %v876
        %v878 = vpop.f32.mrb[0].mxu0
        %v879 = vadd.f32 0.0, %v878
        %v880 = vpop.f32.mrb[0].mxu0
        %v881 = vadd.f32 0.0, %v880
        %v882 = vpop.f32.mrb[0].mxu0
        %v883 = vadd.f32 0.0, %v882
        %884 = vmatprep.mubr.bf16.mxu0 0
        %885 = vmatmul.mubr.bf16.gmra.mrb[0].mxu0 %v779
        %v886 = vpop.f32.mrb[0].mxu0
        %v887 = vadd.f32 0.0, %v886
        %v888 = vpop.f32.mrb[0].mxu0
        %v889 = vadd.f32 0.0, %v888
        %v890 = vpop.f32.mrb[0].mxu0
        %v891 = vadd.f32 0.0, %v890
        %v892 = vpop.f32.mrb[0].mxu0
        %v893 = vadd.f32 0.0, %v892
        %894 = vmatprep.mubr.bf16.mxu0 0
        %895 = vmatmul.mubr.bf16.gmra.mrb[0].mxu0 %v782
        %v896 = vpop.f32.mrb[0].mxu0
        %v897 = vadd.f32 0.0, %v896
        %v898 = vpop.f32.mrb[0].mxu0
        %v899 = vadd.f32 0.0, %v898
        %v900 = vpop.f32.mrb[0].mxu0
        %v901 = vadd.f32 0.0, %v900
        %v902 = vpop.f32.mrb[0].mxu0
        %v903 = vadd.f32 0.0, %v902
        %904 = vmatprep.mubr.bf16.mxu0 0
        %905 = vmatmul.mubr.bf16.gmra.mrb[0].mxu0 %v785
        %v906 = vpop.f32.mrb[0].mxu0
        %v907 = vadd.f32 0.0, %v906
        %v908 = vpop.f32.mrb[0].mxu0
        %v909 = vadd.f32 0.0, %v908
        %v910 = vpop.f32.mrb[0].mxu0
        %v911 = vadd.f32 0.0, %v910
        %v912 = vpop.f32.mrb[0].mxu0
        %v913 = vadd.f32 0.0, %v912
        %914 = vmatprep.mubr.bf16.mxu0 0
        %915 = vmatmul.mubr.bf16.gmra.mrb[0].mxu0 %v788
        %v916 = vpop.f32.mrb[0].mxu0
        %v917 = vadd.f32 0.0, %v916
        %v918 = vpop.f32.mrb[0].mxu0
        %v919 = vadd.f32 0.0, %v918
        %v920 = vpop.f32.mrb[0].mxu0
        %v921 = vadd.f32 0.0, %v920
        %v922 = vpop.f32.mrb[0].mxu0
        %v923 = vadd.f32 0.0, %v922
        %924 = vmatprep.mubr.bf16.mxu0 0
        %925 = vmatmul.mubr.bf16.gmra.mrb[0].mxu0 %v791
        %v926 = vpop.f32.mrb[0].mxu0
        %v927 = vadd.f32 0.0, %v926
        %v928 = vpop.f32.mrb[0].mxu0
        %v929 = vadd.f32 0.0, %v928
        %v930 = vpop.f32.mrb[0].mxu0
        %v931 = vadd.f32 0.0, %v930
        %v932 = vpop.f32.mrb[0].mxu0
        %v933 = vadd.f32 0.0, %v932
        %934 = vmatprep.mubr.bf16.mxu0 0
        %935 = vmatmul.mubr.bf16.gmra.mrb[0].mxu0 %v794
        %v936 = vpop.f32.mrb[0].mxu0
        %v937 = vadd.f32 0.0, %v936
        %v938 = vpop.f32.mrb[0].mxu0
        %v939 = vadd.f32 0.0, %v938
        %v940 = vpop.f32.mrb[0].mxu0
        %v941 = vadd.f32 0.0, %v940
        %v942 = vpop.f32.mrb[0].mxu0
        %v943 = vadd.f32 0.0, %v942
        %944 = vmatprep.mubr.bf16.mxu0 0
        %945 = vmatmul.mubr.bf16.gmra.mrb[0].mxu0 %v797
        %v946 = vpop.f32.mrb[0].mxu0
        %v947 = vadd.f32 0.0, %v946
        %v948 = vpop.f32.mrb[0].mxu0
        %v949 = vadd.f32 0.0, %v948
        %v950 = vpop.f32.mrb[0].mxu0
        %v951 = vadd.f32 0.0, %v950
        %v952 = vpop.f32.mrb[0].mxu0
        %v953 = vadd.f32 0.0, %v952
        %954 = vmatprep.mubr.bf16.mxu0 0
        %955 = vmatmul.mubr.bf16.gmra.mrb[0].mxu0 %v800
        %v956 = vpop.f32.mrb[0].mxu0
        %v957 = vadd.f32 0.0, %v956
        %v958 = vpop.f32.mrb[0].mxu0
        %v959 = vadd.f32 0.0, %v958
        %v960 = vpop.f32.mrb[0].mxu0
        %v961 = vadd.f32 0.0, %v960
        %v962 = vpop.f32.mrb[0].mxu0
        %v963 = vadd.f32 0.0, %v962
        %964 = vmatprep.mubr.bf16.mxu0 0
        %965 = vmatmul.mubr.bf16.gmra.mrb[0].mxu0 %v803
        %v966 = vpop.f32.mrb[0].mxu0
        %v967 = vadd.f32 0.0, %v966
        %v968 = vpop.f32.mrb[0].mxu0
        %v969 = vadd.f32 0.0, %v968
        %v970 = vpop.f32.mrb[0].mxu0
        %v971 = vpop.f32.mrb[0].mxu0
        %972 = vdwg.mxu0
        %v973 = vld [vmem:[%s6] sm:$0xff]
        %v974 = vld [vmem:[%s6 + $0x8] sm:$0xff]
        %v975 = vld [vmem:[%s6 + $0x10] sm:$0xff]
        %v976 = vld [vmem:[%s6 + $0x18] sm:$0xff]
        %v977 = vld [vmem:[%s6 + $0x20] sm:$0xff]
        %v978 = vld [vmem:[%s6 + $0x28] sm:$0xff]
        %v979 = vld [vmem:[%s6 + $0x30] sm:$0xff]
        %v980 = vld [vmem:[%s6 + $0x38] sm:$0xff]
        %v981 = vld [vmem:[%s6 + $0x40] sm:$0xff]
        %v982 = vld [vmem:[%s6 + $0x48] sm:$0xff]
        %v983 = vld [vmem:[%s6 + $0x50] sm:$0xff]
        %v984 = vld [vmem:[%s6 + $0x58] sm:$0xff]
        %v985 = vld [vmem:[%s6 + $0x60] sm:$0xff]
        %v986 = vld [vmem:[%s6 + $0x68] sm:$0xff]
        %v987 = vld [vmem:[%s6 + $0x70] sm:$0xff]
        %v988 = vld [vmem:[%s6 + $0x78] sm:$0xff]
        %v989 = vld [vmem:[%s6 + $0x80] sm:$0xff]
        %v990 = vld [vmem:[%s6 + $0x88] sm:$0xff]
        %v991 = vld [vmem:[%s6 + $0x90] sm:$0xff]
        %v992 = vld [vmem:[%s6 + $0x98] sm:$0xff]
        %v993 = vld [vmem:[%s6 + $0xa0] sm:$0xff]
        %v994 = vld [vmem:[%s6 + $0xa8] sm:$0xff]
        %v995 = vld [vmem:[%s6 + $0xb0] sm:$0xff]
        %v996 = vld [vmem:[%s6 + $0xb8] sm:$0xff]
        %v997 = vld [vmem:[%s6 + $0xc0] sm:$0xff]
        %v998 = vunpack.c.l.bf16 %v973
        %v999 = vunpack.c.h.bf16 %v973
        %v1000 = vunpack.c.l.bf16 %v974
        %v1001 = vunpack.c.h.bf16 %v974
        %v1002 = vunpack.c.l.bf16 %v975
        %v1003 = vunpack.c.h.bf16 %v975
        %v1004 = vunpack.c.l.bf16 %v976
        %v1005 = vunpack.c.h.bf16 %v976
        %v1006 = vunpack.c.l.bf16 %v977
        %v1007 = vunpack.c.h.bf16 %v977
        %v1008 = vunpack.c.l.bf16 %v978
        %v1009 = vunpack.c.h.bf16 %v978
        %v1010 = vunpack.c.l.bf16 %v979
        %v1011 = vunpack.c.h.bf16 %v979
        %v1012 = vunpack.c.l.bf16 %v980
        %v1013 = vunpack.c.h.bf16 %v980
        %v1014 = vunpack.c.l.bf16 %v981
        %v1015 = vunpack.c.h.bf16 %v981
        %v1016 = vunpack.c.l.bf16 %v982
        %v1017 = vunpack.c.h.bf16 %v982
        %v1018 = vunpack.c.l.bf16 %v983
        %v1019 = vunpack.c.h.bf16 %v983
        %v1020 = vunpack.c.l.bf16 %v984
        %v1021 = vunpack.c.h.bf16 %v984
        %v1022 = vunpack.c.l.bf16 %v985
        %v1023 = vunpack.c.h.bf16 %v985
        %v1024 = vunpack.c.l.bf16 %v986
        %v1025 = vunpack.c.h.bf16 %v986
        %v1026 = vunpack.c.l.bf16 %v987
        %v1027 = vunpack.c.h.bf16 %v987
        %v1028 = vunpack.c.l.bf16 %v988
        %v1029 = vunpack.c.h.bf16 %v988
        %v1030 = vunpack.c.l.bf16 %v989
        %v1031 = vunpack.c.h.bf16 %v989
        %v1032 = vunpack.c.l.bf16 %v990
        %v1033 = vunpack.c.h.bf16 %v990
        %v1034 = vunpack.c.l.bf16 %v991
        %v1035 = vunpack.c.h.bf16 %v991
        %v1036 = vunpack.c.l.bf16 %v992
        %v1037 = vunpack.c.h.bf16 %v992
        %v1038 = vunpack.c.l.bf16 %v993
        %v1039 = vunpack.c.h.bf16 %v993
        %v1040 = vunpack.c.l.bf16 %v994
        %v1041 = vunpack.c.h.bf16 %v994
        %v1042 = vunpack.c.l.bf16 %v995
        %v1043 = vunpack.c.h.bf16 %v995
        %v1044 = vunpack.c.l.bf16 %v996
        %v1045 = vunpack.c.h.bf16 %v996
        %v1046 = vunpack.c.l.bf16 %v997
        %v1047 = vunpack.c.h.bf16 %v997
        %v1048 = vmul.f32 %v847, %v998
        %v1049 = vmul.f32 %v849, %v999
        %v1050 = vmul.f32 %v851, %v1000
        %v1051 = vmul.f32 %v853, %v1001
        %v1052 = vmul.f32 %v857, %v1002
        %v1053 = vmul.f32 %v859, %v1003
        %v1054 = vmul.f32 %v861, %v1004
        %v1055 = vmul.f32 %v863, %v1005
        %v1056 = vmul.f32 %v867, %v1006
        %v1057 = vmul.f32 %v869, %v1007
        %v1058 = vmul.f32 %v871, %v1008
        %v1059 = vmul.f32 %v873, %v1009
        %v1060 = vmul.f32 %v877, %v1010
        %v1061 = vmul.f32 %v879, %v1011
        %v1062 = vmul.f32 %v881, %v1012
        %v1063 = vmul.f32 %v883, %v1013
        %v1064 = vmul.f32 %v887, %v1014
        %v1065 = vmul.f32 %v889, %v1015
        %v1066 = vmul.f32 %v891, %v1016
        %v1067 = vmul.f32 %v893, %v1017
        %v1068 = vmul.f32 %v897, %v1018
        %v1069 = vmul.f32 %v899, %v1019
        %v1070 = vmul.f32 %v901, %v1020
        %v1071 = vmul.f32 %v903, %v1021
        %v1072 = vmul.f32 %v907, %v1022
        %v1073 = vmul.f32 %v909, %v1023
        %v1074 = vmul.f32 %v911, %v1024
        %v1075 = vmul.f32 %v913, %v1025
        %v1076 = vmul.f32 %v917, %v1026
        %v1077 = vmul.f32 %v919, %v1027
        %v1078 = vmul.f32 %v921, %v1028
        %v1079 = vmul.f32 %v923, %v1029
        %v1080 = vmul.f32 %v927, %v1030
        %v1081 = vmul.f32 %v929, %v1031
        %v1082 = vmul.f32 %v931, %v1032
        %v1083 = vmul.f32 %v933, %v1033
        %v1084 = vmul.f32 %v937, %v1034
        %v1085 = vmul.f32 %v939, %v1035
        %v1086 = vmul.f32 %v941, %v1036
        %v1087 = vmul.f32 %v943, %v1037
        %v1088 = vmul.f32 %v947, %v1038
        %v1089 = vmul.f32 %v949, %v1039
        %v1090 = vmul.f32 %v951, %v1040
        %v1091 = vmul.f32 %v953, %v1041
        %v1092 = vmul.f32 %v957, %v1042
        %v1093 = vmul.f32 %v959, %v1043
        %v1094 = vmul.f32 %v961, %v1044
        %v1095 = vmul.f32 %v963, %v1045
        %v1096 = vmul.f32 %v967, %v1046
        %v1097 = vmul.f32 %v969, %v1047
        %1098 = vrot.lane.b32.xlu0 %v1048, 17
        %v1099 = vpop.permute.xlu0 %1098
        %1100 = vrot.lane.b32.xlu0 %v1049, 17
        %v1101 = vpop.permute.xlu0 %1100
        %v1102 = vsel %vm595, %v1099, %v1101
        %v1103 = vsel %vm595, %v1101, %v1099
        %v1104 = vadd.f32 %v1103, 0.0
        %v1105 = vadd.f32 %v1102, 0.0
        %1106 = vrot.lane.b32.xlu0 %v1050, 16
        %v1107 = vpop.permute.xlu0 %1106
        %1108 = vrot.lane.b32.xlu0 %v1051, 16
        %v1109 = vpop.permute.xlu0 %1108
        %v1110 = vsel %vm604, %v1107, %v1109
        %v1111 = vsel %vm604, %v1109, %v1107
        %v1112 = vadd.f32 %v1104, %v1111
        %v1113 = vadd.f32 %v1105, %v1110
        %1114 = vrot.lane.b32.xlu0 %v1052, 15
        %v1115 = vpop.permute.xlu0 %1114
        %1116 = vrot.lane.b32.xlu0 %v1053, 15
        %v1117 = vpop.permute.xlu0 %1116
        %v1118 = vsel %vm613, %v1115, %v1117
        %v1119 = vsel %vm613, %v1117, %v1115
        %v1120 = vadd.f32 %v1112, %v1119
        %v1121 = vadd.f32 %v1113, %v1118
        %1122 = vrot.lane.b32.xlu0 %v1054, 14
        %v1123 = vpop.permute.xlu0 %1122
        %1124 = vrot.lane.b32.xlu0 %v1055, 14
        %v1125 = vpop.permute.xlu0 %1124
        %vm1126 = vcmp.lt.s32.totalorder %v594, 14
        %v1127 = vsel %vm1126, %v1123, %v1125
        %v1128 = vsel %vm1126, %v1125, %v1123
        %v1129 = vadd.f32 %v1120, %v1128
        %v1130 = vadd.f32 %v1121, %v1127
        %1131 = vrot.lane.b32.xlu0 %v1056, 13
        %v1132 = vpop.permute.xlu0 %1131
        %1133 = vrot.lane.b32.xlu0 %v1057, 13
        %v1134 = vpop.permute.xlu0 %1133
        %vm1135 = vcmp.lt.s32.totalorder %v594, 13
        %v1136 = vsel %vm1135, %v1132, %v1134
        %v1137 = vsel %vm1135, %v1134, %v1132
        %v1138 = vadd.f32 %v1129, %v1137
        %v1139 = vadd.f32 %v1130, %v1136
        %1140 = vrot.lane.b32.xlu0 %v1058, 1
        %v1141 = vpop.permute.xlu0 %1140
        %1142 = vrot.lane.b32.xlu0 %v1059, 1
        %v1143 = vpop.permute.xlu0 %1142
        %v1144 = vsel %vm622, %v1141, %v1143
        %v1145 = vsel %vm622, %v1143, %v1141
        %v1146 = vadd.f32 %v1138, %v1145
        %v1147 = vadd.f32 %v1139, %v1144
        %v1148 = vadd.f32 %v1146, %v1060
        %v1149 = vadd.f32 %v1147, %v1061
        %1150 = vrot.lane.b32.xlu0 %v1062, 127
        %v1151 = vpop.permute.xlu0 %1150
        %1152 = vrot.lane.b32.xlu0 %v1063, 127
        %v1153 = vpop.permute.xlu0 %1152
        %v1154 = vsel %vm633, %v1151, %v1153
        %v1155 = vsel %vm633, %v1153, %v1151
        %v1156 = vadd.f32 %v1148, %v1154
        %v1157 = vadd.f32 %v1149, %v1155
        %1158 = vrot.lane.b32.xlu0 %v1064, 126
        %v1159 = vpop.permute.xlu0 %1158
        %1160 = vrot.lane.b32.xlu0 %v1065, 126
        %v1161 = vpop.permute.xlu0 %1160
        %vm1162 = vcmp.lt.s32.totalorder %v594, 126
        %v1163 = vsel %vm1162, %v1159, %v1161
        %v1164 = vsel %vm1162, %v1161, %v1159
        %v1165 = vadd.f32 %v1156, %v1163
        %v1166 = vadd.f32 %v1157, %v1164
        %1167 = vrot.lane.b32.xlu0 %v1066, 125
        %v1168 = vpop.permute.xlu0 %1167
        %1169 = vrot.lane.b32.xlu0 %v1067, 125
        %v1170 = vpop.permute.xlu0 %1169
        %vm1171 = vcmp.lt.s32.totalorder %v594, 125
        %v1172 = vsel %vm1171, %v1168, %v1170
        %v1173 = vsel %vm1171, %v1170, %v1168
        %v1174 = vadd.f32 %v1165, %v1172
        %v1175 = vadd.f32 %v1166, %v1173
        %1176 = vrot.lane.b32.xlu0 %v1068, 113
        %v1177 = vpop.permute.xlu0 %1176
        %1178 = vrot.lane.b32.xlu0 %v1069, 113
        %v1179 = vpop.permute.xlu0 %1178
        %v1180 = vsel %vm642, %v1177, %v1179
        %v1181 = vsel %vm642, %v1179, %v1177
        %v1182 = vadd.f32 %v1174, %v1180
        %v1183 = vadd.f32 %v1175, %v1181
        %1184 = vrot.lane.b32.xlu0 %v1070, 112
        %v1185 = vpop.permute.xlu0 %1184
        %1186 = vrot.lane.b32.xlu0 %v1071, 112
        %v1187 = vpop.permute.xlu0 %1186
        %v1188 = vsel %vm651, %v1185, %v1187
        %v1189 = vsel %vm651, %v1187, %v1185
        %v1190 = vadd.f32 %v1182, %v1188
        %v1191 = vadd.f32 %v1183, %v1189
        %1192 = vrot.lane.b32.xlu0 %v1072, 111
        %v1193 = vpop.permute.xlu0 %1192
        %1194 = vrot.lane.b32.xlu0 %v1073, 111
        %v1195 = vpop.permute.xlu0 %1194
        %v1196 = vsel %vm660, %v1193, %v1195
        %v1197 = vsel %vm660, %v1195, %v1193
        %v1198 = vadd.f32 %v1190, %v1196
        %v1199 = vadd.f32 %v1191, %v1197
        %1200 = vrot.lane.b32.xlu0 %v1074, 110
        %v1201 = vpop.permute.xlu0 %1200
        %1202 = vrot.lane.b32.xlu0 %v1075, 110
        %v1203 = vpop.permute.xlu0 %1202
        %vm1204 = vcmp.lt.s32.totalorder %v594, 110
        %v1205 = vsel %vm1204, %v1201, %v1203
        %v1206 = vsel %vm1204, %v1203, %v1201
        %v1207 = vadd.f32 %v1198, %v1205
        %v1208 = vadd.f32 %v1199, %v1206
        %1209 = vrot.lane.b32.xlu0 %v1076, 109
        %v1210 = vpop.permute.xlu0 %1209
        %1211 = vrot.lane.b32.xlu0 %v1077, 109
        %v1212 = vpop.permute.xlu0 %1211
        %vm1213 = vcmp.lt.s32.totalorder %v594, 109
        %v1214 = vsel %vm1213, %v1210, %v1212
        %v1215 = vsel %vm1213, %v1212, %v1210
        %v1216 = vadd.f32 %v1207, %v1214
        %v1217 = vadd.f32 %v1208, %v1215
        %1218 = vrot.lane.b32.xlu0 %v1078, 97
        %v1219 = vpop.permute.xlu0 %1218
        %1220 = vrot.lane.b32.xlu0 %v1079, 97
        %v1221 = vpop.permute.xlu0 %1220
        %vm1222 = vcmp.lt.s32.totalorder %v594, 97
        %v1223 = vsel %vm1222, %v1219, %v1221
        %v1224 = vsel %vm1222, %v1221, %v1219
        %v1225 = vadd.f32 %v1216, %v1223
        %v1226 = vadd.f32 %v1217, %v1224
        %1227 = vrot.lane.b32.xlu0 %v1080, 96
        %v1228 = vpop.permute.xlu0 %1227
        %1229 = vrot.lane.b32.xlu0 %v1081, 96
        %v1230 = vpop.permute.xlu0 %1229
        %vm1231 = vcmp.lt.s32.totalorder %v594, 96
        %v1232 = vsel %vm1231, %v1228, %v1230
        %v1233 = vsel %vm1231, %v1230, %v1228
        %v1234 = vadd.f32 %v1225, %v1232
        %v1235 = vadd.f32 %v1226, %v1233
        %1236 = vrot.lane.b32.xlu0 %v1082, 95
        %v1237 = vpop.permute.xlu0 %1236
        %1238 = vrot.lane.b32.xlu0 %v1083, 95
        %v1239 = vpop.permute.xlu0 %1238
        %vm1240 = vcmp.lt.s32.totalorder %v594, 95
        %v1241 = vsel %vm1240, %v1237, %v1239
        %v1242 = vsel %vm1240, %v1239, %v1237
        %v1243 = vadd.f32 %v1234, %v1241
        %v1244 = vadd.f32 %v1235, %v1242
        %1245 = vrot.lane.b32.xlu0 %v1084, 94
        %v1246 = vpop.permute.xlu0 %1245
        %1247 = vrot.lane.b32.xlu0 %v1085, 94
        %v1248 = vpop.permute.xlu0 %1247
        %vm1249 = vcmp.lt.s32.totalorder %v594, 94
        %v1250 = vsel %vm1249, %v1246, %v1248
        %v1251 = vsel %vm1249, %v1248, %v1246
        %v1252 = vadd.f32 %v1243, %v1250
        %v1253 = vadd.f32 %v1244, %v1251
        %1254 = vrot.lane.b32.xlu0 %v1086, 93
        %v1255 = vpop.permute.xlu0 %1254
        %1256 = vrot.lane.b32.xlu0 %v1087, 93
        %v1257 = vpop.permute.xlu0 %1256
        %vm1258 = vcmp.lt.s32.totalorder %v594, 93
        %v1259 = vsel %vm1258, %v1255, %v1257
        %v1260 = vsel %vm1258, %v1257, %v1255
        %v1261 = vadd.f32 %v1252, %v1259
        %v1262 = vadd.f32 %v1253, %v1260
        %1263 = vrot.lane.b32.xlu0 %v1088, 81
        %v1264 = vpop.permute.xlu0 %1263
        %1265 = vrot.lane.b32.xlu0 %v1089, 81
        %v1266 = vpop.permute.xlu0 %1265
        %vm1267 = vcmp.lt.s32.totalorder %v594, 81
        %v1268 = vsel %vm1267, %v1264, %v1266
        %v1269 = vsel %vm1267, %v1266, %v1264
        %v1270 = vadd.f32 %v1261, %v1268
        %v1271 = vadd.f32 %v1262, %v1269
        %1272 = vrot.lane.b32.xlu0 %v1090, 80
        %v1273 = vpop.permute.xlu0 %1272
        %1274 = vrot.lane.b32.xlu0 %v1091, 80
        %v1275 = vpop.permute.xlu0 %1274
        %vm1276 = vcmp.lt.s32.totalorder %v594, 80
        %v1277 = vsel %vm1276, %v1273, %v1275
        %v1278 = vsel %vm1276, %v1275, %v1273
        %v1279 = vadd.f32 %v1270, %v1277
        %v1280 = vadd.f32 %v1271, %v1278
        %1281 = vrot.lane.b32.xlu0 %v1092, 79
        %v1282 = vpop.permute.xlu0 %1281
        %1283 = vrot.lane.b32.xlu0 %v1093, 79
        %v1284 = vpop.permute.xlu0 %1283
        %vm1285 = vcmp.lt.s32.totalorder %v594, 79
        %v1286 = vsel %vm1285, %v1282, %v1284
        %v1287 = vsel %vm1285, %v1284, %v1282
        %v1288 = vadd.f32 %v1279, %v1286
        %v1289 = vadd.f32 %v1280, %v1287
        %1290 = vrot.lane.b32.xlu0 %v1094, 78
        %v1291 = vpop.permute.xlu0 %1290
        %1292 = vrot.lane.b32.xlu0 %v1095, 78
        %v1293 = vpop.permute.xlu0 %1292
        %vm1294 = vcmp.lt.s32.totalorder %v594, 78
        %v1295 = vsel %vm1294, %v1291, %v1293
        %v1296 = vsel %vm1294, %v1293, %v1291
        %v1297 = vadd.f32 %v1288, %v1295
        %v1298 = vadd.f32 %v1289, %v1296
        %1299 = vrot.lane.b32.xlu0 %v1096, 77
        %v1300 = vpop.permute.xlu0 %1299
        %1301 = vrot.lane.b32.xlu0 %v1097, 77
        %v1302 = vpop.permute.xlu0 %1301
        %vm1303 = vcmp.lt.s32.totalorder %v594, 77
        %v1304 = vsel %vm1303, %v1300, %v1302
        %v1305 = vsel %vm1303, %v1302, %v1300
        %v1306 = vadd.f32 %v1297, %v1304
        %v1307 = vadd.f32 %v1298, %v1305
        %v1308 = vld [vmem:[%s5] sm:$0xff]
        %1310 = vset.pattern.permute.xlu0 0
        %1311 = vperm.xlu0 %1310, %v1308
        %v1312 = vpop.permute.xlu0 %1311
        %v1314 = vadd.f32 %v1306, %v1312
        %v1315 = vadd.f32 %v1307, %v1312
        %v1316 = vmax.f32 %v1314, 0.0
        %v1317 = vmax.f32 %v1315, 0.0
        %v1318 = vpack.c.bf16 %v1316, %v1316
        %v1319 = vpack.c.bf16 %v1317, %v1317
        %v1320 = vld [vmem:[%s7] sm:$0xf]
        %v1321 = vld [vmem:[%s7 + $0x4] sm:$0xf]
        %v1322 = vld [vmem:[%s7 + $0x8] sm:$0xf]
        %v1323 = vld [vmem:[%s7 + $0xc] sm:$0xf]
        %v1324 = vld [vmem:[%s7 + $0x10] sm:$0xf]
        %v1325 = vld [vmem:[%s7 + $0x14] sm:$0xf]
        %v1326 = vld [vmem:[%s7 + $0x18] sm:$0xf]
        %v1327 = vld [vmem:[%s7 + $0x1c] sm:$0xf]
        %v1328 = vld [vmem:[%s7 + $0x20] sm:$0xf]
        %v1329 = vld [vmem:[%s7 + $0x24] sm:$0xf]
        %v1330 = vld [vmem:[%s7 + $0x28] sm:$0xf]
        %v1331 = vld [vmem:[%s7 + $0x2c] sm:$0xf]
        %v1332 = vld [vmem:[%s7 + $0x30] sm:$0xf]
        %v1333 = vld [vmem:[%s7 + $0x34] sm:$0xf]
        %v1334 = vld [vmem:[%s7 + $0x38] sm:$0xf]
        %v1335 = vld [vmem:[%s7 + $0x3c] sm:$0xf]
        %v1336 = vld [vmem:[%s7 + $0x40] sm:$0xf]
        %v1337 = vld [vmem:[%s7 + $0x44] sm:$0xf]
        %v1338 = vld [vmem:[%s7 + $0x48] sm:$0xf]
        %v1339 = vld [vmem:[%s7 + $0x4c] sm:$0xf]
        %v1340 = vld [vmem:[%s7 + $0x50] sm:$0xf]
        %v1341 = vld [vmem:[%s7 + $0x54] sm:$0xf]
        %v1342 = vld [vmem:[%s7 + $0x58] sm:$0xf]
        %v1343 = vld [vmem:[%s7 + $0x5c] sm:$0xf]
        %v1344 = vld [vmem:[%s7 + $0x60] sm:$0xf]
        %v1370 = vunpack.c.l.b16 %v1320
        %v1371 = vunpack.c.l.b16 %v1321
        %v1372 = vunpack.c.l.b16 %v1322
        %v1373 = vunpack.c.l.b16 %v1323
        %v1374 = vunpack.c.l.b16 %v1324
        %v1375 = vunpack.c.l.b16 %v1325
        %v1376 = vunpack.c.l.b16 %v1326
        %v1377 = vunpack.c.l.b16 %v1327
        %v1378 = vunpack.c.l.b16 %v1328
        %v1379 = vunpack.c.l.b16 %v1329
        %v1380 = vunpack.c.l.b16 %v1330
        %v1381 = vunpack.c.l.b16 %v1331
        %v1382 = vunpack.c.l.b16 %v1332
        %v1383 = vunpack.c.l.b16 %v1333
        %v1384 = vunpack.c.l.b16 %v1334
        %v1385 = vunpack.c.l.b16 %v1335
        %v1386 = vunpack.c.l.b16 %v1336
        %v1387 = vunpack.c.l.b16 %v1337
        %v1388 = vunpack.c.l.b16 %v1338
        %v1389 = vunpack.c.l.b16 %v1339
        %v1390 = vunpack.c.l.b16 %v1340
        %v1391 = vunpack.c.l.b16 %v1341
        %v1392 = vunpack.c.l.b16 %v1342
        %v1393 = vunpack.c.l.b16 %v1343
        %v1394 = vunpack.c.l.b16 %v1344
        %v1395 = vpack.c.b16 %v1371, %v1370
        %v1396 = vpack.c.b16 %v1373, %v1372
        %v1397 = vpack.c.b16 %v1375, %v1374
        %v1398 = vpack.c.b16 %v1377, %v1376
        %v1399 = vpack.c.b16 %v1379, %v1378
        %v1400 = vpack.c.b16 %v1381, %v1380
        %v1401 = vpack.c.b16 %v1383, %v1382
        %v1402 = vpack.c.b16 %v1385, %v1384
        %v1403 = vpack.c.b16 %v1387, %v1386
        %v1404 = vpack.c.b16 %v1389, %v1388
        %v1405 = vpack.c.b16 %v1391, %v1390
        %v1406 = vpack.c.b16 %v1393, %v1392
        %v1407 = vpack.c.b16 %v1394, %v1394
        %v1409 = vsel %vm765, %v1395, 0
        %v1412 = vsel %vm765, %v1396, 0
        %v1415 = vsel %vm765, %v1397, 0
        %v1418 = vsel %vm765, %v1398, 0
        %v1421 = vsel %vm765, %v1399, 0
        %v1424 = vsel %vm765, %v1400, 0
        %v1427 = vsel %vm765, %v1401, 0
        %v1430 = vsel %vm765, %v1402, 0
        %v1433 = vsel %vm765, %v1403, 0
        %v1436 = vsel %vm765, %v1404, 0
        %v1439 = vsel %vm765, %v1405, 0
        %v1442 = vsel %vm765, %v1406, 0
        %v1445 = vsel %vm765, %v1407, 0
        %v1448 = vsel %vm805, %v1318, 0
        %v1451 = vsel %vm805, %v1319, 0
        %1453 = vmatprep.subr.bf16.mxu0 %v1451
        %1454 = vmatpush1.bf16.msra.mxu0 %v1448
        %1455 = vmatprep.subr.bf16.mxu0 0
        %1456 = vmatpush1.bf16.msra.mxu0 0
        %1457 = vmatprep.subr.bf16.mxu0 0
        %1458 = vmatpush1.bf16.msra.mxu0 0
        %1459 = vmatprep.subr.bf16.mxu0 0
        %1460 = vmatpush1.bf16.msra.mxu0 0
        %1461 = vmatprep.subr.bf16.mxu0 0
        %1462 = vmatpush1.bf16.msra.mxu0 0
        %1463 = vmatprep.subr.bf16.mxu0 0
        %1464 = vmatpush1.bf16.msra.mxu0 0
        %1465 = vmatprep.subr.bf16.mxu0 0
        %1466 = vmatpush1.bf16.msra.mxu0 0
        %1467 = vmatprep.subr.bf16.mxu0 0
        %1468 = vmatpush1.bf16.msra.mxu0 0
        %1469 = vmatprep.subr.bf16.mxu0 0
        %1470 = vmatpush1.bf16.msra.mxu0 0
        %1471 = vmatprep.subr.bf16.mxu0 0
        %1472 = vmatpush1.bf16.msra.mxu0 0
        %1473 = vmatprep.subr.bf16.mxu0 0
        %1474 = vmatpush1.bf16.msra.mxu0 0
        %1475 = vmatprep.subr.bf16.mxu0 0
        %1476 = vmatpush1.bf16.msra.mxu0 0
        %1477 = vmatprep.subr.bf16.mxu0 0
        %1478 = vmatpush1.bf16.msra.mxu0 0
        %1479 = vmatprep.subr.bf16.mxu0 0
        %1480 = vmatpush1.bf16.msra.mxu0 0
        %1481 = vmatprep.subr.bf16.mxu0 0
        %1482 = vmatpush1.bf16.msra.mxu0 0
        %1483 = vmatprep.subr.bf16.mxu0 0
        %1484 = vmatpush1.bf16.msra.mxu0 0
        %1485 = vmatprep.mubr.bf16.mxu0 0
        %1486 = vmatmul.mubr.bf16.gmra.mrb[0].mxu0 %v1409
        %v1487 = vpop.f32.mrb[0].mxu0
        %v1488 = vadd.f32 0.0, %v1487
        %v1489 = vpop.f32.mrb[0].mxu0
        %v1490 = vadd.f32 0.0, %v1489
        %v1491 = vpop.f32.mrb[0].mxu0
        %v1492 = vadd.f32 0.0, %v1491
        %v1493 = vpop.f32.mrb[0].mxu0
        %v1494 = vadd.f32 0.0, %v1493
        %1495 = vmatprep.mubr.bf16.mxu0 0
        %1496 = vmatmul.mubr.bf16.gmra.mrb[0].mxu0 %v1412
        %v1497 = vpop.f32.mrb[0].mxu0
        %v1498 = vadd.f32 0.0, %v1497
        %v1499 = vpop.f32.mrb[0].mxu0
        %v1500 = vadd.f32 0.0, %v1499
        %v1501 = vpop.f32.mrb[0].mxu0
        %v1502 = vadd.f32 0.0, %v1501
        %v1503 = vpop.f32.mrb[0].mxu0
        %v1504 = vadd.f32 0.0, %v1503
        %1505 = vmatprep.mubr.bf16.mxu0 0
        %1506 = vmatmul.mubr.bf16.gmra.mrb[0].mxu0 %v1415
        %v1507 = vpop.f32.mrb[0].mxu0
        %v1508 = vadd.f32 0.0, %v1507
        %v1509 = vpop.f32.mrb[0].mxu0
        %v1510 = vadd.f32 0.0, %v1509
        %v1511 = vpop.f32.mrb[0].mxu0
        %v1512 = vadd.f32 0.0, %v1511
        %v1513 = vpop.f32.mrb[0].mxu0
        %v1514 = vadd.f32 0.0, %v1513
        %1515 = vmatprep.mubr.bf16.mxu0 0
        %1516 = vmatmul.mubr.bf16.gmra.mrb[0].mxu0 %v1418
        %v1517 = vpop.f32.mrb[0].mxu0
        %v1518 = vadd.f32 0.0, %v1517
        %v1519 = vpop.f32.mrb[0].mxu0
        %v1520 = vadd.f32 0.0, %v1519
        %v1521 = vpop.f32.mrb[0].mxu0
        %v1522 = vadd.f32 0.0, %v1521
        %v1523 = vpop.f32.mrb[0].mxu0
        %v1524 = vadd.f32 0.0, %v1523
        %1525 = vmatprep.mubr.bf16.mxu0 0
        %1526 = vmatmul.mubr.bf16.gmra.mrb[0].mxu0 %v1421
        %v1527 = vpop.f32.mrb[0].mxu0
        %v1528 = vadd.f32 0.0, %v1527
        %v1529 = vpop.f32.mrb[0].mxu0
        %v1530 = vadd.f32 0.0, %v1529
        %v1531 = vpop.f32.mrb[0].mxu0
        %v1532 = vadd.f32 0.0, %v1531
        %v1533 = vpop.f32.mrb[0].mxu0
        %v1534 = vadd.f32 0.0, %v1533
        %1535 = vmatprep.mubr.bf16.mxu0 0
        %1536 = vmatmul.mubr.bf16.gmra.mrb[0].mxu0 %v1424
        %v1537 = vpop.f32.mrb[0].mxu0
        %v1538 = vadd.f32 0.0, %v1537
        %v1539 = vpop.f32.mrb[0].mxu0
        %v1540 = vadd.f32 0.0, %v1539
        %v1541 = vpop.f32.mrb[0].mxu0
        %v1542 = vadd.f32 0.0, %v1541
        %v1543 = vpop.f32.mrb[0].mxu0
        %v1544 = vadd.f32 0.0, %v1543
        %1545 = vmatprep.mubr.bf16.mxu0 0
        %1546 = vmatmul.mubr.bf16.gmra.mrb[0].mxu0 %v1427
        %v1547 = vpop.f32.mrb[0].mxu0
        %v1548 = vadd.f32 0.0, %v1547
        %v1549 = vpop.f32.mrb[0].mxu0
        %v1550 = vadd.f32 0.0, %v1549
        %v1551 = vpop.f32.mrb[0].mxu0
        %v1552 = vadd.f32 0.0, %v1551
        %v1553 = vpop.f32.mrb[0].mxu0
        %v1554 = vadd.f32 0.0, %v1553
        %1555 = vmatprep.mubr.bf16.mxu0 0
        %1556 = vmatmul.mubr.bf16.gmra.mrb[0].mxu0 %v1430
        %v1557 = vpop.f32.mrb[0].mxu0
        %v1558 = vadd.f32 0.0, %v1557
        %v1559 = vpop.f32.mrb[0].mxu0
        %v1560 = vadd.f32 0.0, %v1559
        %v1561 = vpop.f32.mrb[0].mxu0
        %v1562 = vadd.f32 0.0, %v1561
        %v1563 = vpop.f32.mrb[0].mxu0
        %v1564 = vadd.f32 0.0, %v1563
        %1565 = vmatprep.mubr.bf16.mxu0 0
        %1566 = vmatmul.mubr.bf16.gmra.mrb[0].mxu0 %v1433
        %v1567 = vpop.f32.mrb[0].mxu0
        %v1568 = vadd.f32 0.0, %v1567
        %v1569 = vpop.f32.mrb[0].mxu0
        %v1570 = vadd.f32 0.0, %v1569
        %v1571 = vpop.f32.mrb[0].mxu0
        %v1572 = vadd.f32 0.0, %v1571
        %v1573 = vpop.f32.mrb[0].mxu0
        %v1574 = vadd.f32 0.0, %v1573
        %1575 = vmatprep.mubr.bf16.mxu0 0
        %1576 = vmatmul.mubr.bf16.gmra.mrb[0].mxu0 %v1436
        %v1577 = vpop.f32.mrb[0].mxu0
        %v1578 = vadd.f32 0.0, %v1577
        %v1579 = vpop.f32.mrb[0].mxu0
        %v1580 = vadd.f32 0.0, %v1579
        %v1581 = vpop.f32.mrb[0].mxu0
        %v1582 = vadd.f32 0.0, %v1581
        %v1583 = vpop.f32.mrb[0].mxu0
        %v1584 = vadd.f32 0.0, %v1583
        %1585 = vmatprep.mubr.bf16.mxu0 0
        %1586 = vmatmul.mubr.bf16.gmra.mrb[0].mxu0 %v1439
        %v1587 = vpop.f32.mrb[0].mxu0
        %v1588 = vadd.f32 0.0, %v1587
        %v1589 = vpop.f32.mrb[0].mxu0
        %v1590 = vadd.f32 0.0, %v1589
        %v1591 = vpop.f32.mrb[0].mxu0
        %v1592 = vadd.f32 0.0, %v1591
        %v1593 = vpop.f32.mrb[0].mxu0
        %v1594 = vadd.f32 0.0, %v1593
        %1595 = vmatprep.mubr.bf16.mxu0 0
        %1596 = vmatmul.mubr.bf16.gmra.mrb[0].mxu0 %v1442
        %v1597 = vpop.f32.mrb[0].mxu0
        %v1598 = vadd.f32 0.0, %v1597
        %v1599 = vpop.f32.mrb[0].mxu0
        %v1600 = vadd.f32 0.0, %v1599
        %v1601 = vpop.f32.mrb[0].mxu0
        %v1602 = vadd.f32 0.0, %v1601
        %v1603 = vpop.f32.mrb[0].mxu0
        %v1604 = vadd.f32 0.0, %v1603
        %1605 = vmatprep.mubr.bf16.mxu0 0
        %1606 = vmatmul.mubr.bf16.gmra.mrb[0].mxu0 %v1445
        %v1607 = vpop.f32.mrb[0].mxu0
        %v1608 = vadd.f32 0.0, %v1607
        %v1609 = vpop.f32.mrb[0].mxu0
        %v1610 = vadd.f32 0.0, %v1609
        %v1611 = vpop.f32.mrb[0].mxu0
        %v1612 = vpop.f32.mrb[0].mxu0
        %1613 = vdwg.mxu0
        %v1614 = vld [vmem:[%s9] sm:$0xff]
        %v1615 = vld [vmem:[%s9 + $0x8] sm:$0xff]
        %v1616 = vld [vmem:[%s9 + $0x10] sm:$0xff]
        %v1617 = vld [vmem:[%s9 + $0x18] sm:$0xff]
        %v1618 = vld [vmem:[%s9 + $0x20] sm:$0xff]
        %v1619 = vld [vmem:[%s9 + $0x28] sm:$0xff]
        %v1620 = vld [vmem:[%s9 + $0x30] sm:$0xff]
        %v1621 = vld [vmem:[%s9 + $0x38] sm:$0xff]
        %v1622 = vld [vmem:[%s9 + $0x40] sm:$0xff]
        %v1623 = vld [vmem:[%s9 + $0x48] sm:$0xff]
        %v1624 = vld [vmem:[%s9 + $0x50] sm:$0xff]
        %v1625 = vld [vmem:[%s9 + $0x58] sm:$0xff]
        %v1626 = vld [vmem:[%s9 + $0x60] sm:$0xff]
        %v1627 = vld [vmem:[%s9 + $0x68] sm:$0xff]
        %v1628 = vld [vmem:[%s9 + $0x70] sm:$0xff]
        %v1629 = vld [vmem:[%s9 + $0x78] sm:$0xff]
        %v1630 = vld [vmem:[%s9 + $0x80] sm:$0xff]
        %v1631 = vld [vmem:[%s9 + $0x88] sm:$0xff]
        %v1632 = vld [vmem:[%s9 + $0x90] sm:$0xff]
        %v1633 = vld [vmem:[%s9 + $0x98] sm:$0xff]
        %v1634 = vld [vmem:[%s9 + $0xa0] sm:$0xff]
        %v1635 = vld [vmem:[%s9 + $0xa8] sm:$0xff]
        %v1636 = vld [vmem:[%s9 + $0xb0] sm:$0xff]
        %v1637 = vld [vmem:[%s9 + $0xb8] sm:$0xff]
        %v1638 = vld [vmem:[%s9 + $0xc0] sm:$0xff]
        %v1639 = vunpack.c.l.bf16 %v1614
        %v1640 = vunpack.c.h.bf16 %v1614
        %v1641 = vunpack.c.l.bf16 %v1615
        %v1642 = vunpack.c.h.bf16 %v1615
        %v1643 = vunpack.c.l.bf16 %v1616
        %v1644 = vunpack.c.h.bf16 %v1616
        %v1645 = vunpack.c.l.bf16 %v1617
        %v1646 = vunpack.c.h.bf16 %v1617
        %v1647 = vunpack.c.l.bf16 %v1618
        %v1648 = vunpack.c.h.bf16 %v1618
        %v1649 = vunpack.c.l.bf16 %v1619
        %v1650 = vunpack.c.h.bf16 %v1619
        %v1651 = vunpack.c.l.bf16 %v1620
        %v1652 = vunpack.c.h.bf16 %v1620
        %v1653 = vunpack.c.l.bf16 %v1621
        %v1654 = vunpack.c.h.bf16 %v1621
        %v1655 = vunpack.c.l.bf16 %v1622
        %v1656 = vunpack.c.h.bf16 %v1622
        %v1657 = vunpack.c.l.bf16 %v1623
        %v1658 = vunpack.c.h.bf16 %v1623
        %v1659 = vunpack.c.l.bf16 %v1624
        %v1660 = vunpack.c.h.bf16 %v1624
        %v1661 = vunpack.c.l.bf16 %v1625
        %v1662 = vunpack.c.h.bf16 %v1625
        %v1663 = vunpack.c.l.bf16 %v1626
        %v1664 = vunpack.c.h.bf16 %v1626
        %v1665 = vunpack.c.l.bf16 %v1627
        %v1666 = vunpack.c.h.bf16 %v1627
        %v1667 = vunpack.c.l.bf16 %v1628
        %v1668 = vunpack.c.h.bf16 %v1628
        %v1669 = vunpack.c.l.bf16 %v1629
        %v1670 = vunpack.c.h.bf16 %v1629
        %v1671 = vunpack.c.l.bf16 %v1630
        %v1672 = vunpack.c.h.bf16 %v1630
        %v1673 = vunpack.c.l.bf16 %v1631
        %v1674 = vunpack.c.h.bf16 %v1631
        %v1675 = vunpack.c.l.bf16 %v1632
        %v1676 = vunpack.c.h.bf16 %v1632
        %v1677 = vunpack.c.l.bf16 %v1633
        %v1678 = vunpack.c.h.bf16 %v1633
        %v1679 = vunpack.c.l.bf16 %v1634
        %v1680 = vunpack.c.h.bf16 %v1634
        %v1681 = vunpack.c.l.bf16 %v1635
        %v1682 = vunpack.c.h.bf16 %v1635
        %v1683 = vunpack.c.l.bf16 %v1636
        %v1684 = vunpack.c.h.bf16 %v1636
        %v1685 = vunpack.c.l.bf16 %v1637
        %v1686 = vunpack.c.h.bf16 %v1637
        %v1687 = vunpack.c.l.bf16 %v1638
        %v1688 = vunpack.c.h.bf16 %v1638
        %v1689 = vmul.f32 %v1488, %v1639
        %v1690 = vmul.f32 %v1490, %v1640
        %v1691 = vmul.f32 %v1492, %v1641
        %v1692 = vmul.f32 %v1494, %v1642
        %v1693 = vmul.f32 %v1498, %v1643
        %v1694 = vmul.f32 %v1500, %v1644
        %v1695 = vmul.f32 %v1502, %v1645
        %v1696 = vmul.f32 %v1504, %v1646
        %v1697 = vmul.f32 %v1508, %v1647
        %v1698 = vmul.f32 %v1510, %v1648
        %v1699 = vmul.f32 %v1512, %v1649
        %v1700 = vmul.f32 %v1514, %v1650
        %v1701 = vmul.f32 %v1518, %v1651
        %v1702 = vmul.f32 %v1520, %v1652
        %v1703 = vmul.f32 %v1522, %v1653
        %v1704 = vmul.f32 %v1524, %v1654
        %v1705 = vmul.f32 %v1528, %v1655
        %v1706 = vmul.f32 %v1530, %v1656
        %v1707 = vmul.f32 %v1532, %v1657
        %v1708 = vmul.f32 %v1534, %v1658
        %v1709 = vmul.f32 %v1538, %v1659
        %v1710 = vmul.f32 %v1540, %v1660
        %v1711 = vmul.f32 %v1542, %v1661
        %v1712 = vmul.f32 %v1544, %v1662
        %v1713 = vmul.f32 %v1548, %v1663
        %v1714 = vmul.f32 %v1550, %v1664
        %v1715 = vmul.f32 %v1552, %v1665
        %v1716 = vmul.f32 %v1554, %v1666
        %v1717 = vmul.f32 %v1558, %v1667
        %v1718 = vmul.f32 %v1560, %v1668
        %v1719 = vmul.f32 %v1562, %v1669
        %v1720 = vmul.f32 %v1564, %v1670
        %v1721 = vmul.f32 %v1568, %v1671
        %v1722 = vmul.f32 %v1570, %v1672
        %v1723 = vmul.f32 %v1572, %v1673
        %v1724 = vmul.f32 %v1574, %v1674
        %v1725 = vmul.f32 %v1578, %v1675
        %v1726 = vmul.f32 %v1580, %v1676
        %v1727 = vmul.f32 %v1582, %v1677
        %v1728 = vmul.f32 %v1584, %v1678
        %v1729 = vmul.f32 %v1588, %v1679
        %v1730 = vmul.f32 %v1590, %v1680
        %v1731 = vmul.f32 %v1592, %v1681
        %v1732 = vmul.f32 %v1594, %v1682
        %v1733 = vmul.f32 %v1598, %v1683
        %v1734 = vmul.f32 %v1600, %v1684
        %v1735 = vmul.f32 %v1602, %v1685
        %v1736 = vmul.f32 %v1604, %v1686
        %v1737 = vmul.f32 %v1608, %v1687
        %v1738 = vmul.f32 %v1610, %v1688
        %1739 = vrot.lane.b32.xlu0 %v1689, 34
        %v1740 = vpop.permute.xlu0 %1739
        %1741 = vrot.lane.b32.xlu0 %v1690, 34
        %v1742 = vpop.permute.xlu0 %1741
        %vm1743 = vcmp.lt.s32.totalorder %v594, 34
        %v1744 = vsel %vm1743, %v1740, %v1742
        %v1745 = vsel %vm1743, %v1742, %v1740
        %v1746 = vadd.f32 %v1745, 0.0
        %v1747 = vadd.f32 %v1744, 0.0
        %1748 = vrot.lane.b32.xlu0 %v1691, 32
        %v1749 = vpop.permute.xlu0 %1748
        %1750 = vrot.lane.b32.xlu0 %v1692, 32
        %v1751 = vpop.permute.xlu0 %1750
        %vm1752 = vcmp.lt.s32.totalorder %v594, 32
        %v1753 = vsel %vm1752, %v1749, %v1751
        %v1754 = vsel %vm1752, %v1751, %v1749
        %v1755 = vadd.f32 %v1746, %v1754
        %v1756 = vadd.f32 %v1747, %v1753
        %1757 = vrot.lane.b32.xlu0 %v1693, 30
        %v1758 = vpop.permute.xlu0 %1757
        %1759 = vrot.lane.b32.xlu0 %v1694, 30
        %v1760 = vpop.permute.xlu0 %1759
        %vm1761 = vcmp.lt.s32.totalorder %v594, 30
        %v1762 = vsel %vm1761, %v1758, %v1760
        %v1763 = vsel %vm1761, %v1760, %v1758
        %v1764 = vadd.f32 %v1755, %v1763
        %v1765 = vadd.f32 %v1756, %v1762
        %1766 = vrot.lane.b32.xlu0 %v1695, 28
        %v1767 = vpop.permute.xlu0 %1766
        %1768 = vrot.lane.b32.xlu0 %v1696, 28
        %v1769 = vpop.permute.xlu0 %1768
        %vm1770 = vcmp.lt.s32.totalorder %v594, 28
        %v1771 = vsel %vm1770, %v1767, %v1769
        %v1772 = vsel %vm1770, %v1769, %v1767
        %v1773 = vadd.f32 %v1764, %v1772
        %v1774 = vadd.f32 %v1765, %v1771
        %1775 = vrot.lane.b32.xlu0 %v1697, 26
        %v1776 = vpop.permute.xlu0 %1775
        %1777 = vrot.lane.b32.xlu0 %v1698, 26
        %v1778 = vpop.permute.xlu0 %1777
        %vm1779 = vcmp.lt.s32.totalorder %v594, 26
        %v1780 = vsel %vm1779, %v1776, %v1778
        %v1781 = vsel %vm1779, %v1778, %v1776
        %v1782 = vadd.f32 %v1773, %v1781
        %v1783 = vadd.f32 %v1774, %v1780
        %1784 = vrot.lane.b32.xlu0 %v1699, 2
        %v1785 = vpop.permute.xlu0 %1784
        %1786 = vrot.lane.b32.xlu0 %v1700, 2
        %v1787 = vpop.permute.xlu0 %1786
        %vm1788 = vcmp.lt.s32.totalorder %v594, 2
        %v1789 = vsel %vm1788, %v1785, %v1787
        %v1790 = vsel %vm1788, %v1787, %v1785
        %v1791 = vadd.f32 %v1782, %v1790
        %v1792 = vadd.f32 %v1783, %v1789
        %v1793 = vadd.f32 %v1791, %v1701
        %v1794 = vadd.f32 %v1792, %v1702
        %1795 = vrot.lane.b32.xlu0 %v1703, 126
        %v1796 = vpop.permute.xlu0 %1795
        %1797 = vrot.lane.b32.xlu0 %v1704, 126
        %v1798 = vpop.permute.xlu0 %1797
        %v1799 = vsel %vm1162, %v1796, %v1798
        %v1800 = vsel %vm1162, %v1798, %v1796
        %v1801 = vadd.f32 %v1793, %v1799
        %v1802 = vadd.f32 %v1794, %v1800
        %1803 = vrot.lane.b32.xlu0 %v1705, 124
        %v1804 = vpop.permute.xlu0 %1803
        %1805 = vrot.lane.b32.xlu0 %v1706, 124
        %v1806 = vpop.permute.xlu0 %1805
        %vm1807 = vcmp.lt.s32.totalorder %v594, 124
        %v1808 = vsel %vm1807, %v1804, %v1806
        %v1809 = vsel %vm1807, %v1806, %v1804
        %v1810 = vadd.f32 %v1801, %v1808
        %v1811 = vadd.f32 %v1802, %v1809
        %1812 = vrot.lane.b32.xlu0 %v1707, 122
        %v1813 = vpop.permute.xlu0 %1812
        %1814 = vrot.lane.b32.xlu0 %v1708, 122
        %v1815 = vpop.permute.xlu0 %1814
        %vm1816 = vcmp.lt.s32.totalorder %v594, 122
        %v1817 = vsel %vm1816, %v1813, %v1815
        %v1818 = vsel %vm1816, %v1815, %v1813
        %v1819 = vadd.f32 %v1810, %v1817
        %v1820 = vadd.f32 %v1811, %v1818
        %1821 = vrot.lane.b32.xlu0 %v1709, 98
        %v1822 = vpop.permute.xlu0 %1821
        %1823 = vrot.lane.b32.xlu0 %v1710, 98
        %v1824 = vpop.permute.xlu0 %1823
        %vm1825 = vcmp.lt.s32.totalorder %v594, 98
        %v1826 = vsel %vm1825, %v1822, %v1824
        %v1827 = vsel %vm1825, %v1824, %v1822
        %v1828 = vadd.f32 %v1819, %v1826
        %v1829 = vadd.f32 %v1820, %v1827
        %1830 = vrot.lane.b32.xlu0 %v1711, 96
        %v1831 = vpop.permute.xlu0 %1830
        %1832 = vrot.lane.b32.xlu0 %v1712, 96
        %v1833 = vpop.permute.xlu0 %1832
        %v1834 = vsel %vm1231, %v1831, %v1833
        %v1835 = vsel %vm1231, %v1833, %v1831
        %v1836 = vadd.f32 %v1828, %v1834
        %v1837 = vadd.f32 %v1829, %v1835
        %1838 = vrot.lane.b32.xlu0 %v1713, 94
        %v1839 = vpop.permute.xlu0 %1838
        %1840 = vrot.lane.b32.xlu0 %v1714, 94
        %v1841 = vpop.permute.xlu0 %1840
        %v1842 = vsel %vm1249, %v1839, %v1841
        %v1843 = vsel %vm1249, %v1841, %v1839
        %v1844 = vadd.f32 %v1836, %v1842
        %v1845 = vadd.f32 %v1837, %v1843
        %1846 = vrot.lane.b32.xlu0 %v1715, 92
        %v1847 = vpop.permute.xlu0 %1846
        %1848 = vrot.lane.b32.xlu0 %v1716, 92
        %v1849 = vpop.permute.xlu0 %1848
        %vm1850 = vcmp.lt.s32.totalorder %v594, 92
        %v1851 = vsel %vm1850, %v1847, %v1849
        %v1852 = vsel %vm1850, %v1849, %v1847
        %v1853 = vadd.f32 %v1844, %v1851
        %v1854 = vadd.f32 %v1845, %v1852
        %1855 = vrot.lane.b32.xlu0 %v1717, 90
        %v1856 = vpop.permute.xlu0 %1855
        %1857 = vrot.lane.b32.xlu0 %v1718, 90
        %v1858 = vpop.permute.xlu0 %1857
        %vm1859 = vcmp.lt.s32.totalorder %v594, 90
        %v1860 = vsel %vm1859, %v1856, %v1858
        %v1861 = vsel %vm1859, %v1858, %v1856
        %v1862 = vadd.f32 %v1853, %v1860
        %v1863 = vadd.f32 %v1854, %v1861
        %1864 = vrot.lane.b32.xlu0 %v1719, 66
        %v1865 = vpop.permute.xlu0 %1864
        %1866 = vrot.lane.b32.xlu0 %v1720, 66
        %v1867 = vpop.permute.xlu0 %1866
        %vm1868 = vcmp.lt.s32.totalorder %v594, 66
        %v1869 = vsel %vm1868, %v1865, %v1867
        %v1870 = vsel %vm1868, %v1867, %v1865
        %v1871 = vadd.f32 %v1862, %v1869
        %v1872 = vadd.f32 %v1863, %v1870
        %1873 = vrot.lane.b32.xlu0 %v1721, 64
        %v1874 = vpop.permute.xlu0 %1873
        %1875 = vrot.lane.b32.xlu0 %v1722, 64
        %v1876 = vpop.permute.xlu0 %1875
        %vm1877 = vcmp.lt.s32.totalorder %v594, 64
        %v1878 = vsel %vm1877, %v1874, %v1876
        %v1879 = vsel %vm1877, %v1876, %v1874
        %v1880 = vadd.f32 %v1871, %v1878
        %v1881 = vadd.f32 %v1872, %v1879
        %1882 = vrot.lane.b32.xlu0 %v1723, 62
        %v1883 = vpop.permute.xlu0 %1882
        %1884 = vrot.lane.b32.xlu0 %v1724, 62
        %v1885 = vpop.permute.xlu0 %1884
        %vm1886 = vcmp.lt.s32.totalorder %v594, 62
        %v1887 = vsel %vm1886, %v1883, %v1885
        %v1888 = vsel %vm1886, %v1885, %v1883
        %v1889 = vadd.f32 %v1880, %v1887
        %v1890 = vadd.f32 %v1881, %v1888
        %1891 = vrot.lane.b32.xlu0 %v1725, 60
        %v1892 = vpop.permute.xlu0 %1891
        %1893 = vrot.lane.b32.xlu0 %v1726, 60
        %v1894 = vpop.permute.xlu0 %1893
        %vm1895 = vcmp.lt.s32.totalorder %v594, 60
        %v1896 = vsel %vm1895, %v1892, %v1894
        %v1897 = vsel %vm1895, %v1894, %v1892
        %v1898 = vadd.f32 %v1889, %v1896
        %v1899 = vadd.f32 %v1890, %v1897
        %1900 = vrot.lane.b32.xlu0 %v1727, 58
        %v1901 = vpop.permute.xlu0 %1900
        %1902 = vrot.lane.b32.xlu0 %v1728, 58
        %v1903 = vpop.permute.xlu0 %1902
        %vm1904 = vcmp.lt.s32.totalorder %v594, 58
        %v1905 = vsel %vm1904, %v1901, %v1903
        %v1906 = vsel %vm1904, %v1903, %v1901
        %v1907 = vadd.f32 %v1898, %v1905
        %v1908 = vadd.f32 %v1899, %v1906
        %1909 = vrot.lane.b32.xlu0 %v1729, 34
        %v1910 = vpop.permute.xlu0 %1909
        %1911 = vrot.lane.b32.xlu0 %v1730, 34
        %v1912 = vpop.permute.xlu0 %1911
        %v1913 = vsel %vm1743, %v1910, %v1912
        %v1914 = vsel %vm1743, %v1912, %v1910
        %v1915 = vadd.f32 %v1907, %v1913
        %v1916 = vadd.f32 %v1908, %v1914
        %1917 = vrot.lane.b32.xlu0 %v1731, 32
        %v1918 = vpop.permute.xlu0 %1917
        %1919 = vrot.lane.b32.xlu0 %v1732, 32
        %v1920 = vpop.permute.xlu0 %1919
        %v1921 = vsel %vm1752, %v1918, %v1920
        %v1922 = vsel %vm1752, %v1920, %v1918
        %v1923 = vadd.f32 %v1915, %v1921
        %v1924 = vadd.f32 %v1916, %v1922
        %1925 = vrot.lane.b32.xlu0 %v1733, 30
        %v1926 = vpop.permute.xlu0 %1925
        %1927 = vrot.lane.b32.xlu0 %v1734, 30
        %v1928 = vpop.permute.xlu0 %1927
        %v1929 = vsel %vm1761, %v1926, %v1928
        %v1930 = vsel %vm1761, %v1928, %v1926
        %v1931 = vadd.f32 %v1923, %v1929
        %v1932 = vadd.f32 %v1924, %v1930
        %1933 = vrot.lane.b32.xlu0 %v1735, 28
        %v1934 = vpop.permute.xlu0 %1933
        %1935 = vrot.lane.b32.xlu0 %v1736, 28
        %v1936 = vpop.permute.xlu0 %1935
        %v1937 = vsel %vm1770, %v1934, %v1936
        %v1938 = vsel %vm1770, %v1936, %v1934
        %v1939 = vadd.f32 %v1931, %v1937
        %v1940 = vadd.f32 %v1932, %v1938
        %1941 = vrot.lane.b32.xlu0 %v1737, 26
        %v1942 = vpop.permute.xlu0 %1941
        %1943 = vrot.lane.b32.xlu0 %v1738, 26
        %v1944 = vpop.permute.xlu0 %1943
        %v1945 = vsel %vm1779, %v1942, %v1944
        %v1946 = vsel %vm1779, %v1944, %v1942
        %v1947 = vadd.f32 %v1939, %v1945
        %v1948 = vadd.f32 %v1940, %v1946
        %v1949 = vld [vmem:[%s8] sm:$0xff]
        %1951 = vset.pattern.permute.xlu0 0
        %1952 = vperm.xlu0 %1951, %v1949
        %v1953 = vpop.permute.xlu0 %1952
        %v1955 = vadd.f32 %v1947, %v1953
        %v1956 = vadd.f32 %v1948, %v1953
        %v1957 = vpack.c.bf16 %v1955, %v1955
        %v1958 = vpack.c.bf16 %v1956, %v1956
        %v1959 = vld [vmem:[%s10] sm:$0xf]
        %v1960 = vld [vmem:[%s10 + $0x4] sm:$0xf]
        %v1961 = vld [vmem:[%s10 + $0x8] sm:$0xf]
        %v1962 = vld [vmem:[%s10 + $0xc] sm:$0xf]
        %v1963 = vld [vmem:[%s10 + $0x10] sm:$0xf]
        %v1964 = vld [vmem:[%s10 + $0x14] sm:$0xf]
        %v1965 = vld [vmem:[%s10 + $0x18] sm:$0xf]
        %v1966 = vld [vmem:[%s10 + $0x1c] sm:$0xf]
        %v1967 = vld [vmem:[%s10 + $0x20] sm:$0xf]
        %v1968 = vld [vmem:[%s10 + $0x24] sm:$0xf]
        %v1969 = vld [vmem:[%s10 + $0x28] sm:$0xf]
        %v1970 = vld [vmem:[%s10 + $0x2c] sm:$0xf]
        %v1971 = vld [vmem:[%s10 + $0x30] sm:$0xf]
        %v1972 = vld [vmem:[%s10 + $0x34] sm:$0xf]
        %v1973 = vld [vmem:[%s10 + $0x38] sm:$0xf]
        %v1974 = vld [vmem:[%s10 + $0x3c] sm:$0xf]
        %v1975 = vld [vmem:[%s10 + $0x40] sm:$0xf]
        %v1976 = vld [vmem:[%s10 + $0x44] sm:$0xf]
        %v1977 = vld [vmem:[%s10 + $0x48] sm:$0xf]
        %v1978 = vld [vmem:[%s10 + $0x4c] sm:$0xf]
        %v1979 = vld [vmem:[%s10 + $0x50] sm:$0xf]
        %v1980 = vld [vmem:[%s10 + $0x54] sm:$0xf]
        %v1981 = vld [vmem:[%s10 + $0x58] sm:$0xf]
        %v1982 = vld [vmem:[%s10 + $0x5c] sm:$0xf]
        %v1983 = vld [vmem:[%s10 + $0x60] sm:$0xf]
        %v1984 = vld [vmem:[%s10 + $0x64] sm:$0xf]
        %v1985 = vld [vmem:[%s10 + $0x68] sm:$0xf]
        %v1986 = vld [vmem:[%s10 + $0x6c] sm:$0xf]
        %v1987 = vld [vmem:[%s10 + $0x70] sm:$0xf]
        %v1988 = vld [vmem:[%s10 + $0x74] sm:$0xf]
        %v1989 = vld [vmem:[%s10 + $0x78] sm:$0xf]
        %v1990 = vld [vmem:[%s10 + $0x7c] sm:$0xf]
        %v2023 = vunpack.c.l.b16 %v1959
        %v2024 = vunpack.c.l.b16 %v1960
        %v2025 = vunpack.c.l.b16 %v1961
        %v2026 = vunpack.c.l.b16 %v1962
        %v2027 = vunpack.c.l.b16 %v1963
        %v2028 = vunpack.c.l.b16 %v1964
        %v2029 = vunpack.c.l.b16 %v1965
        %v2030 = vunpack.c.l.b16 %v1966
        %v2031 = vunpack.c.l.b16 %v1967
        %v2032 = vunpack.c.l.b16 %v1968
        %v2033 = vunpack.c.l.b16 %v1969
        %v2034 = vunpack.c.l.b16 %v1970
        %v2035 = vunpack.c.l.b16 %v1971
        %v2036 = vunpack.c.l.b16 %v1972
        %v2037 = vunpack.c.l.b16 %v1973
        %v2038 = vunpack.c.l.b16 %v1974
        %v2039 = vunpack.c.l.b16 %v1975
        %v2040 = vunpack.c.l.b16 %v1976
        %v2041 = vunpack.c.l.b16 %v1977
        %v2042 = vunpack.c.l.b16 %v1978
        %v2043 = vunpack.c.l.b16 %v1979
        %v2044 = vunpack.c.l.b16 %v1980
        %v2045 = vunpack.c.l.b16 %v1981
        %v2046 = vunpack.c.l.b16 %v1982
        %v2047 = vunpack.c.l.b16 %v1983
        %v2048 = vunpack.c.l.b16 %v1984
        %v2049 = vunpack.c.l.b16 %v1985
        %v2050 = vunpack.c.l.b16 %v1986
        %v2051 = vunpack.c.l.b16 %v1987
        %v2052 = vunpack.c.l.b16 %v1988
        %v2053 = vunpack.c.l.b16 %v1989
        %v2054 = vunpack.c.l.b16 %v1990
        %v2055 = vpack.c.b16 %v2024, %v2023
        %v2056 = vpack.c.b16 %v2026, %v2025
        %v2057 = vpack.c.b16 %v2028, %v2027
        %v2058 = vpack.c.b16 %v2030, %v2029
        %v2059 = vpack.c.b16 %v2032, %v2031
        %v2060 = vpack.c.b16 %v2034, %v2033
        %v2061 = vpack.c.b16 %v2036, %v2035
        %v2062 = vpack.c.b16 %v2038, %v2037
        %v2063 = vpack.c.b16 %v2040, %v2039
        %v2064 = vpack.c.b16 %v2042, %v2041
        %v2065 = vpack.c.b16 %v2044, %v2043
        %v2066 = vpack.c.b16 %v2046, %v2045
        %v2067 = vpack.c.b16 %v2048, %v2047
        %v2068 = vpack.c.b16 %v2050, %v2049
        %v2069 = vpack.c.b16 %v2052, %v2051
        %v2070 = vpack.c.b16 %v2054, %v2053
        %2087 = vmatprep.subr.bf16.mxu0 0
        %2088 = vmatpush1.bf16.msra.mxu0 %v2055
        %2089 = vmatprep.subr.bf16.mxu0 0
        %2090 = vmatpush1.bf16.msra.mxu0 %v2056
        %2091 = vmatprep.subr.bf16.mxu0 0
        %2092 = vmatpush1.bf16.msra.mxu0 %v2057
        %2093 = vmatprep.subr.bf16.mxu0 0
        %2094 = vmatpush1.bf16.msra.mxu0 %v2058
        %2095 = vmatprep.subr.bf16.mxu0 0
        %2096 = vmatpush1.bf16.msra.mxu0 %v2059
        %2097 = vmatprep.subr.bf16.mxu0 0
        %2098 = vmatpush1.bf16.msra.mxu0 %v2060
        %2099 = vmatprep.subr.bf16.mxu0 0
        %2100 = vmatpush1.bf16.msra.mxu0 %v2061
        %2101 = vmatprep.subr.bf16.mxu0 0
        %2102 = vmatpush1.bf16.msra.mxu0 %v2062
        %2103 = vmatprep.subr.bf16.mxu0 0
        %2104 = vmatpush1.bf16.msra.mxu0 %v2063
        %2105 = vmatprep.subr.bf16.mxu0 0
        %2106 = vmatpush1.bf16.msra.mxu0 %v2064
        %2107 = vmatprep.subr.bf16.mxu0 0
        %2108 = vmatpush1.bf16.msra.mxu0 %v2065
        %2109 = vmatprep.subr.bf16.mxu0 0
        %2110 = vmatpush1.bf16.msra.mxu0 %v2066
        %2111 = vmatprep.subr.bf16.mxu0 0
        %2112 = vmatpush1.bf16.msra.mxu0 %v2067
        %2113 = vmatprep.subr.bf16.mxu0 0
        %2114 = vmatpush1.bf16.msra.mxu0 %v2068
        %2115 = vmatprep.subr.bf16.mxu0 0
        %2116 = vmatpush1.bf16.msra.mxu0 %v2069
        %2117 = vmatprep.subr.bf16.mxu0 0
        %2118 = vmatpush1.bf16.msra.mxu0 %v2070
        %2119 = vmatprep.mubr.bf16.mxu0 %v1958
        %2120 = vmatmul.mubr.bf16.gmra.mrb[0].mxu0 %v1957
        %v2121 = vpop.f32.mrb[0].mxu0
        %v2122 = vadd.f32 0.0, %v2121
        %v2123 = vpop.f32.mrb[0].mxu0
        %v2124 = vpop.f32.mrb[0].mxu0
        %v2125 = vpop.f32.mrb[0].mxu0
        %2126 = vdwg.mxu0
        %vm2127 = vcmask 130048
        %2128 = vst.msk [vmem:[%s399] sm:$0xff] %vm2127, %v2122
        %p2129 = scmp.lt.s32.totalorder %s23, 1
        %s2130 = scalar_select %p2129, %s23, 1
        %s2131 = smul.addr %s2130, 8
        %s2132 = scalar_lea.vmem %s11, %s2131
        // Predicated region
        $region69: #{hyper_encoder_pallas.1} parent=63 // pred_check
          %p2133 = pneg %p277
        $region70: #{hyper_encoder_pallas.1} parent=63 // pred_check_branch
          %2135 = sbr.rel (%p2133) target = $region72
        $region71: #{hyper_encoder_pallas.1} parent=63 // pred_region
          _
        $region72: #{hyper_encoder_pallas.1} parent=63 // pred_fallthru
          _
      $region64: #{hyper_encoder_pallas.1} parent=5 // pred_fallthru
        _
      %p2136 = scmp.le.s32.totalorder 2, %s18
      // Predicated region
      $region73: #{hyper_encoder_pallas.1} parent=5 // pred_check
        %p2137 = pneg %p2136
      $region74: #{hyper_encoder_pallas.1} parent=5 // pred_check_branch
        %2139 = sbr.rel (%p2137) target = $region76
      $region75: #{hyper_encoder_pallas.1} parent=5 // pred_region
        %s2140 = ssub.s32 %s18, 2
        // Predicated region
        $region77: #{hyper_encoder_pallas.1} parent=75 // pred_check
          %p2141 = pneg %p283
        $region78: #{hyper_encoder_pallas.1} parent=75 // pred_check_branch
          %2143 = sbr.rel (%p2141) target = $region80
        $region79: #{hyper_encoder_pallas.1} parent=75 // pred_region
          %p2144 = scmp.lt.s32.totalorder %s24, 1
          %s2145 = scalar_select %p2144, %s24, 1
          %s2146 = smul.addr %s2145, 8
          %s2147 = scalar_lea.vmem %s11, %s2146
        $region80: #{hyper_encoder_pallas.1} parent=75 // pred_fallthru
          _
      $region76: #{hyper_encoder_pallas.1} parent=5 // pred_fallthru
        _
    $region6: #{hyper_encoder_pallas.1} parent=1 // loop_footer
      %s22 = sadd.s32 1, %s18
    $region7: #{hyper_encoder_pallas.1} parent=1 // loop_footer_branch
      %17 = sbr.rel target = $region3
    $region8: #{hyper_encoder_pallas.1} parent=1 // loop_exit
      _
    %2148 = vsyncpa [#allocation3], 1
    %s2149 = scalar_lea.sflag [#allocation3], 1
    %2150 = vsyncpa %s2149, 1

</llo_original>
